<compile_context>
chip_gen: v6e
topology: v6e:2x2x1
jax: 0.10.0
libtpu: 0.0.40
codegen_flags: <defaults>
</compile_context>

<pallas_src>
import functools
import itertools

import jax
import jax.numpy as jnp
import numpy as np
from jax.experimental import pallas as pl
from jax.experimental.pallas import tpu as pltpu


# ----------------------------------------------------------------------------
# Fused kernel: conv branches + BN(folded) + ReLU + MaxPool + flatten + MLP
# ----------------------------------------------------------------------------
def _fused_kernel(*refs, branch_meta, batch):
    """refs = (x, [w_i, b_i]*n_branch, w1_perm, b1, w2, b2, out)

    x:        (B, C, L)                input, NCW layout (same as torch Conv1d)
    w_i:      (k_i*C, O)               BN-folded conv weight, row = tap*C + chan
    b_i:      (1, O)                   BN-folded conv bias
    w1_perm:  (T*O, H)                 fc1 weight, rows permuted to (window, chan)
    b1:       (1, H)
    w2:       (H, S), b2: (1, S)
    out:      (B, S)
    """
    nb = len(branch_meta)
    x_ref = refs[0]
    br_refs = refs[1:1 + 2 * nb]
    w1_ref, b1_ref, w2_ref, b2_ref, o_ref = refs[1 + 2 * nb:1 + 2 * nb + 5]

    x = x_ref[...]                                 # [B, C, L]

    flat_rows = []
    for b in range(batch):                         # static unroll (B is tiny)
        xt = x[b].T                                # [L, C]: time on sublanes
        cols = []
        for i, (k, d, l_out, pool_k, n_pool) in enumerate(branch_meta):
            w = br_refs[2 * i][...]                # [k*C, O]
            bias = br_refs[2 * i + 1][...]         # [1, O]
            # Pack the k dilated taps on the contraction axis -> one matmul.
            xs = jnp.concatenate(
                [xt[j * d:j * d + l_out, :] for j in range(k)], axis=1)  # [l_out, k*C]
            y = jnp.dot(xs, w, preferred_element_type=jnp.float32) + bias  # [l_out, O]
            y = jnp.maximum(y, 0.0)                # BN already folded; ReLU
            # MaxPool1d(kernel=pool_k, stride=pool_k): window max over sublanes
            # gives a lane-dense [1, O] row per window.
            for p in range(n_pool):
                cols.append(jnp.max(y[p * pool_k:(p + 1) * pool_k, :],
                                    axis=0, keepdims=True))   # [1, O]
        flat_rows.append(jnp.concatenate(cols, axis=1))        # [1, T*O]
    flat = jnp.concatenate(flat_rows, axis=0)                  # [B, T*O]

    # FC head (Dropout = identity in eval mode).
    h = jnp.dot(flat, w1_ref[...], preferred_element_type=jnp.float32) + b1_ref[...]
    h = jnp.maximum(h, 0.0)
    out = jnp.dot(h, w2_ref[...], preferred_element_type=jnp.float32) + b2_ref[...]
    o_ref[...] = out.astype(o_ref.dtype)


def history_feature_forward(x, branches, fc, eps=1e-5):
    """x: [B, C, L]; branches: list of torch-layout conv/BN params; fc: (w1,b1,w2,b2)."""
    B, C, L = x.shape
    O = branches[0]["w"].shape[0]

    meta = []
    folded = []
    for br in branches:
        k, d = br["k"], br["d"]
        l_out = L - d * (k - 1)
        pool_k = C - k + 1
        n_pool = (l_out - pool_k) // pool_k + 1
        assert pool_k >= 1 and n_pool >= 1, "invalid (k, d) for these shapes"
        meta.append((k, d, l_out, pool_k, n_pool))
        # Fold eval-mode BatchNorm (and conv bias) into the conv weight/bias.
        s = br["gamma"] * jax.lax.rsqrt(br["var"] + eps)                 # [O]
        # torch weight [O, C, k] -> [k*C, O] with row index = tap*C + chan
        w_fold = jnp.transpose(br["w"], (2, 1, 0)).reshape(k * C, O) * s[None, :]
        b_fold = ((br["b"] - br["mean"]) * s + br["beta"])[None, :]      # [1, O]
        folded += [w_fold, b_fold]

    T = sum(m[4] for m in meta)                    # total pooled length (conv_size)
    w1, b1, w2, b2 = fc                            # w1: [O*T, H] in torch view(B,-1) order
    H = w1.shape[1]
    S = w2.shape[1]
    # Kernel builds the flat feature in (window, channel) lane order (t*O + o);
    # permute W1 rows from torch order (o*T + t) to match. Free, trace-time.
    w1_perm = w1.reshape(O, T, H).transpose(1, 0, 2).reshape(T * O, H)

    kernel = functools.partial(_fused_kernel, branch_meta=tuple(meta), batch=B)
    n_in = 1 + len(folded) + 4
    return pl.pallas_call(
        kernel,
        out_shape=jax.ShapeDtypeStruct((B, S), jnp.float32),
        in_specs=[pl.BlockSpec(memory_space=pltpu.MemorySpace.VMEM)] * n_in,
        out_specs=pl.BlockSpec(memory_space=pltpu.MemorySpace.VMEM),
    )(x, *folded, w1_perm, b1, w2, b2)


# ----------------------------------------------------------------------------
# Parameter init (deterministic, synthetic, torch-like layouts)
# ----------------------------------------------------------------------------
def init_params(key, C, L, out_channels, ks, ds, hidden, output_size):
    branches = []
    conv_size = 0
    for (k, d) in itertools.product(ks, ds):
        key, kw, kb, kg, kbe, km, kv = jax.random.split(key, 7)
        branches.append(dict(
            k=k, d=d,
            w=0.1 * jax.random.normal(kw, (out_channels, C, k), jnp.float32),
            b=0.1 * jax.random.normal(kb, (out_channels,), jnp.float32),
            gamma=1.0 + 0.1 * jax.random.normal(kg, (out_channels,), jnp.float32),
            beta=0.1 * jax.random.normal(kbe, (out_channels,), jnp.float32),
            mean=0.05 * jax.random.normal(km, (out_channels,), jnp.float32),
            var=1.0 + 0.1 * jax.random.uniform(kv, (out_channels,), jnp.float32),
        ))
        l_out = L - d * (k - 1)
        pool_k = C - k + 1
        conv_size += (l_out - pool_k) // pool_k + 1
    F = out_channels * conv_size
    key, k1, k2, k3, k4 = jax.random.split(key, 5)
    fc = (0.05 * jax.random.normal(k1, (F, hidden), jnp.float32),
          0.05 * jax.random.normal(k2, (1, hidden), jnp.float32),
          0.05 * jax.random.normal(k3, (hidden, output_size), jnp.float32),
          0.05 * jax.random.normal(k4, (1, output_size), jnp.float32))
    return branches, fc


# ----------------------------------------------------------------------------
# Pure-JAX reference (exact torch semantics, un-folded BN) for correctness
# ----------------------------------------------------------------------------
def reference_forward(x, branches, fc, eps=1e-5):
    B, C, L = x.shape
    outs = []
    for br in branches:
        k, d = br["k"], br["d"]
        l_out = L - d * (k - 1)
        acc = jnp.zeros((B, br["w"].shape[0], l_out), jnp.float32)
        for j in range(k):
            acc = acc + jnp.einsum("oc,bct->bot", br["w"][:, :, j],
                                   x[:, :, j * d:j * d + l_out])
        y = acc + br["b"][None, :, None]
        y = (y - br["mean"][None, :, None]) / jnp.sqrt(br["var"][None, :, None] + eps) \
            * br["gamma"][None, :, None] + br["beta"][None, :, None]
        y = jnp.maximum(y, 0.0)
        pool_k = C - k + 1
        n_pool = (l_out - pool_k) // pool_k + 1
        y = y[:, :, :n_pool * pool_k].reshape(B, -1, n_pool, pool_k).max(axis=-1)
        outs.append(y)
    flat = jnp.concatenate(outs, axis=-1).reshape(B, -1)
    w1, b1, w2, b2 = fc
    h = jnp.maximum(flat @ w1 + b1, 0.0)
    return h @ w2 + b2


if __name__ == "__main__":
    # Small shapes consistent with the module: x: [Batch, num_class, num_days]
    B, C, L = 2, 8, 16
    out_channels = 8
    ks, ds = (3, 5), (1, 2)
    hidden, output_size = 256, 10

    key = jax.random.PRNGKey(0)
    key, kx = jax.random.split(key)
    x = jax.random.normal(kx, (B, C, L), jnp.float32)

    branches, fc = init_params(key, C, L, out_channels, ks, ds, hidden, output_size)

    y = history_feature_forward(x, branches, fc)
    y = jax.block_until_ready(y)
    assert y.shape == (B, output_size)

    y_ref = reference_forward(x, branches, fc)
    np.testing.assert_allclose(np.asarray(y), np.asarray(y_ref), rtol=1e-4, atol=1e-4)

    print("KERNEL_OK")
</pallas_src>

<mosaic_0001>
module attributes {stable_mosaic.version = 11 : i64} {
  func.func @_fused_kernel(%arg0: memref<2x8x16xf32, #tpu.memory_space<vmem>>, %arg1: memref<24x8xf32, #tpu.memory_space<vmem>>, %arg2: memref<1x8xf32, #tpu.memory_space<vmem>>, %arg3: memref<24x8xf32, #tpu.memory_space<vmem>>, %arg4: memref<1x8xf32, #tpu.memory_space<vmem>>, %arg5: memref<40x8xf32, #tpu.memory_space<vmem>>, %arg6: memref<1x8xf32, #tpu.memory_space<vmem>>, %arg7: memref<40x8xf32, #tpu.memory_space<vmem>>, %arg8: memref<1x8xf32, #tpu.memory_space<vmem>>, %arg9: memref<72x256xf32, #tpu.memory_space<vmem>>, %arg10: memref<1x256xf32, #tpu.memory_space<vmem>>, %arg11: memref<256x10xf32, #tpu.memory_space<vmem>>, %arg12: memref<1x10xf32, #tpu.memory_space<vmem>>, %arg13: memref<2x10xf32, #tpu.memory_space<vmem>>) attributes {dimension_semantics = [], scalar_prefetch = 0 : i64, scratch_operands = 0 : i64, tpu.core_type = #tpu.core_type<tc>} {
    %c0 = arith.constant 0 : index
    %c0_0 = arith.constant 0 : index
    %c0_1 = arith.constant 0 : index
    %0 = vector.load %arg0[%c0, %c0_0, %c0_1] : memref<2x8x16xf32, #tpu.memory_space<vmem>>, vector<2x8x16xf32>
    %1 = vector.extract_strided_slice %0 {offsets = [0, 0, 0], sizes = [1, 8, 16], strides = [1, 1, 1]} : vector<2x8x16xf32> to vector<1x8x16xf32>
    %2 = vector.shape_cast %1 : vector<1x8x16xf32> to vector<8x16xf32>
    %3 = tpu.transpose %2, [1, 0] : vector<8x16xf32> -> vector<16x8xf32>
    %c0_2 = arith.constant 0 : index
    %c0_3 = arith.constant 0 : index
    %4 = vector.load %arg1[%c0_2, %c0_3] : memref<24x8xf32, #tpu.memory_space<vmem>>, vector<24x8xf32>
    %c0_4 = arith.constant 0 : index
    %c0_5 = arith.constant 0 : index
    %5 = vector.load %arg2[%c0_4, %c0_5] : memref<1x8xf32, #tpu.memory_space<vmem>>, vector<1x8xf32>
    %6 = vector.extract_strided_slice %3 {offsets = [0, 0], sizes = [14, 8], strides = [1, 1]} : vector<16x8xf32> to vector<14x8xf32>
    %7 = vector.extract_strided_slice %3 {offsets = [1, 0], sizes = [14, 8], strides = [1, 1]} : vector<16x8xf32> to vector<14x8xf32>
    %8 = vector.extract_strided_slice %3 {offsets = [2, 0], sizes = [14, 8], strides = [1, 1]} : vector<16x8xf32> to vector<14x8xf32>
    %9 = tpu.concatenate %6, %7, %8 in 1 : vector<14x8xf32>, vector<14x8xf32>, vector<14x8xf32> -> vector<14x24xf32>
    %cst = arith.constant dense<0.000000e+00> : vector<14x8xf32>
    %10 = tpu.matmul %9, %4, %cst {dimension_numbers = #tpu.dot_dimension_numbers<[1], [0], [0], [1], [0, 0, 1, 1], [], []>} : vector<14x24xf32>, vector<24x8xf32>, vector<14x8xf32> -> vector<14x8xf32>
    %11 = vector.broadcast %5 : vector<1x8xf32> to vector<14x8xf32>
    %12 = arith.addf %10, %11 : vector<14x8xf32>
    %cst_6 = arith.constant 0.000000e+00 : f32
    %13 = vector.broadcast %cst_6 : f32 to vector<14x8xf32>
    %14 = arith.maximumf %12, %13 : vector<14x8xf32>
    %15 = vector.extract_strided_slice %14 {offsets = [0, 0], sizes = [6, 8], strides = [1, 1]} : vector<14x8xf32> to vector<6x8xf32>
    %cst_7 = arith.constant dense<0xFF800000> : vector<8xf32>
    %16 = vector.multi_reduction <maximumf>, %15, %cst_7 [0] : vector<6x8xf32> to vector<8xf32>
    %17 = vector.shape_cast %16 : vector<8xf32> to vector<1x8xf32>
    %18 = vector.extract_strided_slice %14 {offsets = [6, 0], sizes = [6, 8], strides = [1, 1]} : vector<14x8xf32> to vector<6x8xf32>
    %cst_8 = arith.constant dense<0xFF800000> : vector<8xf32>
    %19 = vector.multi_reduction <maximumf>, %18, %cst_8 [0] : vector<6x8xf32> to vector<8xf32>
    %20 = vector.shape_cast %19 : vector<8xf32> to vector<1x8xf32>
    %c0_9 = arith.constant 0 : index
    %c0_10 = arith.constant 0 : index
    %21 = vector.load %arg3[%c0_9, %c0_10] : memref<24x8xf32, #tpu.memory_space<vmem>>, vector<24x8xf32>
    %c0_11 = arith.constant 0 : index
    %c0_12 = arith.constant 0 : index
    %22 = vector.load %arg4[%c0_11, %c0_12] : memref<1x8xf32, #tpu.memory_space<vmem>>, vector<1x8xf32>
    %23 = vector.extract_strided_slice %3 {offsets = [0, 0], sizes = [12, 8], strides = [1, 1]} : vector<16x8xf32> to vector<12x8xf32>
    %24 = vector.extract_strided_slice %3 {offsets = [2, 0], sizes = [12, 8], strides = [1, 1]} : vector<16x8xf32> to vector<12x8xf32>
    %25 = vector.extract_strided_slice %3 {offsets = [4, 0], sizes = [12, 8], strides = [1, 1]} : vector<16x8xf32> to vector<12x8xf32>
    %26 = tpu.concatenate %23, %24, %25 in 1 : vector<12x8xf32>, vector<12x8xf32>, vector<12x8xf32> -> vector<12x24xf32>
    %cst_13 = arith.constant dense<0.000000e+00> : vector<12x8xf32>
    %27 = tpu.matmul %26, %21, %cst_13 {dimension_numbers = #tpu.dot_dimension_numbers<[1], [0], [0], [1], [0, 0, 1, 1], [], []>} : vector<12x24xf32>, vector<24x8xf32>, vector<12x8xf32> -> vector<12x8xf32>
    %28 = vector.broadcast %22 : vector<1x8xf32> to vector<12x8xf32>
    %29 = arith.addf %27, %28 : vector<12x8xf32>
    %cst_14 = arith.constant 0.000000e+00 : f32
    %30 = vector.broadcast %cst_14 : f32 to vector<12x8xf32>
    %31 = arith.maximumf %29, %30 : vector<12x8xf32>
    %32 = vector.extract_strided_slice %31 {offsets = [0, 0], sizes = [6, 8], strides = [1, 1]} : vector<12x8xf32> to vector<6x8xf32>
    %cst_15 = arith.constant dense<0xFF800000> : vector<8xf32>
    %33 = vector.multi_reduction <maximumf>, %32, %cst_15 [0] : vector<6x8xf32> to vector<8xf32>
    %34 = vector.shape_cast %33 : vector<8xf32> to vector<1x8xf32>
    %35 = vector.extract_strided_slice %31 {offsets = [6, 0], sizes = [6, 8], strides = [1, 1]} : vector<12x8xf32> to vector<6x8xf32>
    %cst_16 = arith.constant dense<0xFF800000> : vector<8xf32>
    %36 = vector.multi_reduction <maximumf>, %35, %cst_16 [0] : vector<6x8xf32> to vector<8xf32>
    %37 = vector.shape_cast %36 : vector<8xf32> to vector<1x8xf32>
    %c0_17 = arith.constant 0 : index
    %c0_18 = arith.constant 0 : index
    %38 = vector.load %arg5[%c0_17, %c0_18] : memref<40x8xf32, #tpu.memory_space<vmem>>, vector<40x8xf32>
    %c0_19 = arith.constant 0 : index
    %c0_20 = arith.constant 0 : index
    %39 = vector.load %arg6[%c0_19, %c0_20] : memref<1x8xf32, #tpu.memory_space<vmem>>, vector<1x8xf32>
    %40 = vector.extract_strided_slice %3 {offsets = [0, 0], sizes = [12, 8], strides = [1, 1]} : vector<16x8xf32> to vector<12x8xf32>
    %41 = vector.extract_strided_slice %3 {offsets = [1, 0], sizes = [12, 8], strides = [1, 1]} : vector<16x8xf32> to vector<12x8xf32>
    %42 = vector.extract_strided_slice %3 {offsets = [2, 0], sizes = [12, 8], strides = [1, 1]} : vector<16x8xf32> to vector<12x8xf32>
    %43 = vector.extract_strided_slice %3 {offsets = [3, 0], sizes = [12, 8], strides = [1, 1]} : vector<16x8xf32> to vector<12x8xf32>
    %44 = vector.extract_strided_slice %3 {offsets = [4, 0], sizes = [12, 8], strides = [1, 1]} : vector<16x8xf32> to vector<12x8xf32>
    %45 = tpu.concatenate %40, %41, %42, %43, %44 in 1 : vector<12x8xf32>, vector<12x8xf32>, vector<12x8xf32>, vector<12x8xf32>, vector<12x8xf32> -> vector<12x40xf32>
    %cst_21 = arith.constant dense<0.000000e+00> : vector<12x8xf32>
    %46 = tpu.matmul %45, %38, %cst_21 {dimension_numbers = #tpu.dot_dimension_numbers<[1], [0], [0], [1], [0, 0, 1, 1], [], []>} : vector<12x40xf32>, vector<40x8xf32>, vector<12x8xf32> -> vector<12x8xf32>
    %47 = vector.broadcast %39 : vector<1x8xf32> to vector<12x8xf32>
    %48 = arith.addf %46, %47 : vector<12x8xf32>
    %cst_22 = arith.constant 0.000000e+00 : f32
    %49 = vector.broadcast %cst_22 : f32 to vector<12x8xf32>
    %50 = arith.maximumf %48, %49 : vector<12x8xf32>
    %51 = vector.extract_strided_slice %50 {offsets = [0, 0], sizes = [4, 8], strides = [1, 1]} : vector<12x8xf32> to vector<4x8xf32>
    %cst_23 = arith.constant dense<0xFF800000> : vector<8xf32>
    %52 = vector.multi_reduction <maximumf>, %51, %cst_23 [0] : vector<4x8xf32> to vector<8xf32>
    %53 = vector.shape_cast %52 : vector<8xf32> to vector<1x8xf32>
    %54 = vector.extract_strided_slice %50 {offsets = [4, 0], sizes = [4, 8], strides = [1, 1]} : vector<12x8xf32> to vector<4x8xf32>
    %cst_24 = arith.constant dense<0xFF800000> : vector<8xf32>
    %55 = vector.multi_reduction <maximumf>, %54, %cst_24 [0] : vector<4x8xf32> to vector<8xf32>
    %56 = vector.shape_cast %55 : vector<8xf32> to vector<1x8xf32>
    %57 = vector.extract_strided_slice %50 {offsets = [8, 0], sizes = [4, 8], strides = [1, 1]} : vector<12x8xf32> to vector<4x8xf32>
    %cst_25 = arith.constant dense<0xFF800000> : vector<8xf32>
    %58 = vector.multi_reduction <maximumf>, %57, %cst_25 [0] : vector<4x8xf32> to vector<8xf32>
    %59 = vector.shape_cast %58 : vector<8xf32> to vector<1x8xf32>
    %c0_26 = arith.constant 0 : index
    %c0_27 = arith.constant 0 : index
    %60 = vector.load %arg7[%c0_26, %c0_27] : memref<40x8xf32, #tpu.memory_space<vmem>>, vector<40x8xf32>
    %c0_28 = arith.constant 0 : index
    %c0_29 = arith.constant 0 : index
    %61 = vector.load %arg8[%c0_28, %c0_29] : memref<1x8xf32, #tpu.memory_space<vmem>>, vector<1x8xf32>
    %62 = vector.extract_strided_slice %3 {offsets = [0, 0], sizes = [8, 8], strides = [1, 1]} : vector<16x8xf32> to vector<8x8xf32>
    %63 = vector.extract_strided_slice %3 {offsets = [2, 0], sizes = [8, 8], strides = [1, 1]} : vector<16x8xf32> to vector<8x8xf32>
    %64 = vector.extract_strided_slice %3 {offsets = [4, 0], sizes = [8, 8], strides = [1, 1]} : vector<16x8xf32> to vector<8x8xf32>
    %65 = vector.extract_strided_slice %3 {offsets = [6, 0], sizes = [8, 8], strides = [1, 1]} : vector<16x8xf32> to vector<8x8xf32>
    %66 = vector.extract_strided_slice %3 {offsets = [8, 0], sizes = [8, 8], strides = [1, 1]} : vector<16x8xf32> to vector<8x8xf32>
    %67 = tpu.concatenate %62, %63, %64, %65, %66 in 1 : vector<8x8xf32>, vector<8x8xf32>, vector<8x8xf32>, vector<8x8xf32>, vector<8x8xf32> -> vector<8x40xf32>
    %cst_30 = arith.constant dense<0.000000e+00> : vector<8x8xf32>
    %68 = tpu.matmul %67, %60, %cst_30 {dimension_numbers = #tpu.dot_dimension_numbers<[1], [0], [0], [1], [0, 0, 1, 1], [], []>} : vector<8x40xf32>, vector<40x8xf32>, vector<8x8xf32> -> vector<8x8xf32>
    %69 = vector.broadcast %61 : vector<1x8xf32> to vector<8x8xf32>
    %70 = arith.addf %68, %69 : vector<8x8xf32>
    %cst_31 = arith.constant 0.000000e+00 : f32
    %71 = vector.broadcast %cst_31 : f32 to vector<8x8xf32>
    %72 = arith.maximumf %70, %71 : vector<8x8xf32>
    %73 = vector.extract_strided_slice %72 {offsets = [0, 0], sizes = [4, 8], strides = [1, 1]} : vector<8x8xf32> to vector<4x8xf32>
    %cst_32 = arith.constant dense<0xFF800000> : vector<8xf32>
    %74 = vector.multi_reduction <maximumf>, %73, %cst_32 [0] : vector<4x8xf32> to vector<8xf32>
    %75 = vector.shape_cast %74 : vector<8xf32> to vector<1x8xf32>
    %76 = vector.extract_strided_slice %72 {offsets = [4, 0], sizes = [4, 8], strides = [1, 1]} : vector<8x8xf32> to vector<4x8xf32>
    %cst_33 = arith.constant dense<0xFF800000> : vector<8xf32>
    %77 = vector.multi_reduction <maximumf>, %76, %cst_33 [0] : vector<4x8xf32> to vector<8xf32>
    %78 = vector.shape_cast %77 : vector<8xf32> to vector<1x8xf32>
    %79 = tpu.concatenate %17, %20, %34, %37, %53, %56, %59, %75, %78 in 1 : vector<1x8xf32>, vector<1x8xf32>, vector<1x8xf32>, vector<1x8xf32>, vector<1x8xf32>, vector<1x8xf32>, vector<1x8xf32>, vector<1x8xf32>, vector<1x8xf32> -> vector<1x72xf32>
    %80 = vector.extract_strided_slice %0 {offsets = [1, 0, 0], sizes = [1, 8, 16], strides = [1, 1, 1]} : vector<2x8x16xf32> to vector<1x8x16xf32>
    %81 = vector.shape_cast %80 : vector<1x8x16xf32> to vector<8x16xf32>
    %82 = tpu.transpose %81, [1, 0] : vector<8x16xf32> -> vector<16x8xf32>
    %c0_34 = arith.constant 0 : index
    %c0_35 = arith.constant 0 : index
    %83 = vector.load %arg1[%c0_34, %c0_35] : memref<24x8xf32, #tpu.memory_space<vmem>>, vector<24x8xf32>
    %c0_36 = arith.constant 0 : index
    %c0_37 = arith.constant 0 : index
    %84 = vector.load %arg2[%c0_36, %c0_37] : memref<1x8xf32, #tpu.memory_space<vmem>>, vector<1x8xf32>
    %85 = vector.extract_strided_slice %82 {offsets = [0, 0], sizes = [14, 8], strides = [1, 1]} : vector<16x8xf32> to vector<14x8xf32>
    %86 = vector.extract_strided_slice %82 {offsets = [1, 0], sizes = [14, 8], strides = [1, 1]} : vector<16x8xf32> to vector<14x8xf32>
    %87 = vector.extract_strided_slice %82 {offsets = [2, 0], sizes = [14, 8], strides = [1, 1]} : vector<16x8xf32> to vector<14x8xf32>
    %88 = tpu.concatenate %85, %86, %87 in 1 : vector<14x8xf32>, vector<14x8xf32>, vector<14x8xf32> -> vector<14x24xf32>
    %cst_38 = arith.constant dense<0.000000e+00> : vector<14x8xf32>
    %89 = tpu.matmul %88, %83, %cst_38 {dimension_numbers = #tpu.dot_dimension_numbers<[1], [0], [0], [1], [0, 0, 1, 1], [], []>} : vector<14x24xf32>, vector<24x8xf32>, vector<14x8xf32> -> vector<14x8xf32>
    %90 = vector.broadcast %84 : vector<1x8xf32> to vector<14x8xf32>
    %91 = arith.addf %89, %90 : vector<14x8xf32>
    %cst_39 = arith.constant 0.000000e+00 : f32
    %92 = vector.broadcast %cst_39 : f32 to vector<14x8xf32>
    %93 = arith.maximumf %91, %92 : vector<14x8xf32>
    %94 = vector.extract_strided_slice %93 {offsets = [0, 0], sizes = [6, 8], strides = [1, 1]} : vector<14x8xf32> to vector<6x8xf32>
    %cst_40 = arith.constant dense<0xFF800000> : vector<8xf32>
    %95 = vector.multi_reduction <maximumf>, %94, %cst_40 [0] : vector<6x8xf32> to vector<8xf32>
    %96 = vector.shape_cast %95 : vector<8xf32> to vector<1x8xf32>
    %97 = vector.extract_strided_slice %93 {offsets = [6, 0], sizes = [6, 8], strides = [1, 1]} : vector<14x8xf32> to vector<6x8xf32>
    %cst_41 = arith.constant dense<0xFF800000> : vector<8xf32>
    %98 = vector.multi_reduction <maximumf>, %97, %cst_41 [0] : vector<6x8xf32> to vector<8xf32>
    %99 = vector.shape_cast %98 : vector<8xf32> to vector<1x8xf32>
    %c0_42 = arith.constant 0 : index
    %c0_43 = arith.constant 0 : index
    %100 = vector.load %arg3[%c0_42, %c0_43] : memref<24x8xf32, #tpu.memory_space<vmem>>, vector<24x8xf32>
    %c0_44 = arith.constant 0 : index
    %c0_45 = arith.constant 0 : index
    %101 = vector.load %arg4[%c0_44, %c0_45] : memref<1x8xf32, #tpu.memory_space<vmem>>, vector<1x8xf32>
    %102 = vector.extract_strided_slice %82 {offsets = [0, 0], sizes = [12, 8], strides = [1, 1]} : vector<16x8xf32> to vector<12x8xf32>
    %103 = vector.extract_strided_slice %82 {offsets = [2, 0], sizes = [12, 8], strides = [1, 1]} : vector<16x8xf32> to vector<12x8xf32>
    %104 = vector.extract_strided_slice %82 {offsets = [4, 0], sizes = [12, 8], strides = [1, 1]} : vector<16x8xf32> to vector<12x8xf32>
    %105 = tpu.concatenate %102, %103, %104 in 1 : vector<12x8xf32>, vector<12x8xf32>, vector<12x8xf32> -> vector<12x24xf32>
    %cst_46 = arith.constant dense<0.000000e+00> : vector<12x8xf32>
    %106 = tpu.matmul %105, %100, %cst_46 {dimension_numbers = #tpu.dot_dimension_numbers<[1], [0], [0], [1], [0, 0, 1, 1], [], []>} : vector<12x24xf32>, vector<24x8xf32>, vector<12x8xf32> -> vector<12x8xf32>
    %107 = vector.broadcast %101 : vector<1x8xf32> to vector<12x8xf32>
    %108 = arith.addf %106, %107 : vector<12x8xf32>
    %cst_47 = arith.constant 0.000000e+00 : f32
    %109 = vector.broadcast %cst_47 : f32 to vector<12x8xf32>
    %110 = arith.maximumf %108, %109 : vector<12x8xf32>
    %111 = vector.extract_strided_slice %110 {offsets = [0, 0], sizes = [6, 8], strides = [1, 1]} : vector<12x8xf32> to vector<6x8xf32>
    %cst_48 = arith.constant dense<0xFF800000> : vector<8xf32>
    %112 = vector.multi_reduction <maximumf>, %111, %cst_48 [0] : vector<6x8xf32> to vector<8xf32>
    %113 = vector.shape_cast %112 : vector<8xf32> to vector<1x8xf32>
    %114 = vector.extract_strided_slice %110 {offsets = [6, 0], sizes = [6, 8], strides = [1, 1]} : vector<12x8xf32> to vector<6x8xf32>
    %cst_49 = arith.constant dense<0xFF800000> : vector<8xf32>
    %115 = vector.multi_reduction <maximumf>, %114, %cst_49 [0] : vector<6x8xf32> to vector<8xf32>
    %116 = vector.shape_cast %115 : vector<8xf32> to vector<1x8xf32>
    %c0_50 = arith.constant 0 : index
    %c0_51 = arith.constant 0 : index
    %117 = vector.load %arg5[%c0_50, %c0_51] : memref<40x8xf32, #tpu.memory_space<vmem>>, vector<40x8xf32>
    %c0_52 = arith.constant 0 : index
    %c0_53 = arith.constant 0 : index
    %118 = vector.load %arg6[%c0_52, %c0_53] : memref<1x8xf32, #tpu.memory_space<vmem>>, vector<1x8xf32>
    %119 = vector.extract_strided_slice %82 {offsets = [0, 0], sizes = [12, 8], strides = [1, 1]} : vector<16x8xf32> to vector<12x8xf32>
    %120 = vector.extract_strided_slice %82 {offsets = [1, 0], sizes = [12, 8], strides = [1, 1]} : vector<16x8xf32> to vector<12x8xf32>
    %121 = vector.extract_strided_slice %82 {offsets = [2, 0], sizes = [12, 8], strides = [1, 1]} : vector<16x8xf32> to vector<12x8xf32>
    %122 = vector.extract_strided_slice %82 {offsets = [3, 0], sizes = [12, 8], strides = [1, 1]} : vector<16x8xf32> to vector<12x8xf32>
    %123 = vector.extract_strided_slice %82 {offsets = [4, 0], sizes = [12, 8], strides = [1, 1]} : vector<16x8xf32> to vector<12x8xf32>
    %124 = tpu.concatenate %119, %120, %121, %122, %123 in 1 : vector<12x8xf32>, vector<12x8xf32>, vector<12x8xf32>, vector<12x8xf32>, vector<12x8xf32> -> vector<12x40xf32>
    %cst_54 = arith.constant dense<0.000000e+00> : vector<12x8xf32>
    %125 = tpu.matmul %124, %117, %cst_54 {dimension_numbers = #tpu.dot_dimension_numbers<[1], [0], [0], [1], [0, 0, 1, 1], [], []>} : vector<12x40xf32>, vector<40x8xf32>, vector<12x8xf32> -> vector<12x8xf32>
    %126 = vector.broadcast %118 : vector<1x8xf32> to vector<12x8xf32>
    %127 = arith.addf %125, %126 : vector<12x8xf32>
    %cst_55 = arith.constant 0.000000e+00 : f32
    %128 = vector.broadcast %cst_55 : f32 to vector<12x8xf32>
    %129 = arith.maximumf %127, %128 : vector<12x8xf32>
    %130 = vector.extract_strided_slice %129 {offsets = [0, 0], sizes = [4, 8], strides = [1, 1]} : vector<12x8xf32> to vector<4x8xf32>
    %cst_56 = arith.constant dense<0xFF800000> : vector<8xf32>
    %131 = vector.multi_reduction <maximumf>, %130, %cst_56 [0] : vector<4x8xf32> to vector<8xf32>
    %132 = vector.shape_cast %131 : vector<8xf32> to vector<1x8xf32>
    %133 = vector.extract_strided_slice %129 {offsets = [4, 0], sizes = [4, 8], strides = [1, 1]} : vector<12x8xf32> to vector<4x8xf32>
    %cst_57 = arith.constant dense<0xFF800000> : vector<8xf32>
    %134 = vector.multi_reduction <maximumf>, %133, %cst_57 [0] : vector<4x8xf32> to vector<8xf32>
    %135 = vector.shape_cast %134 : vector<8xf32> to vector<1x8xf32>
    %136 = vector.extract_strided_slice %129 {offsets = [8, 0], sizes = [4, 8], strides = [1, 1]} : vector<12x8xf32> to vector<4x8xf32>
    %cst_58 = arith.constant dense<0xFF800000> : vector<8xf32>
    %137 = vector.multi_reduction <maximumf>, %136, %cst_58 [0] : vector<4x8xf32> to vector<8xf32>
    %138 = vector.shape_cast %137 : vector<8xf32> to vector<1x8xf32>
    %c0_59 = arith.constant 0 : index
    %c0_60 = arith.constant 0 : index
    %139 = vector.load %arg7[%c0_59, %c0_60] : memref<40x8xf32, #tpu.memory_space<vmem>>, vector<40x8xf32>
    %c0_61 = arith.constant 0 : index
    %c0_62 = arith.constant 0 : index
    %140 = vector.load %arg8[%c0_61, %c0_62] : memref<1x8xf32, #tpu.memory_space<vmem>>, vector<1x8xf32>
    %141 = vector.extract_strided_slice %82 {offsets = [0, 0], sizes = [8, 8], strides = [1, 1]} : vector<16x8xf32> to vector<8x8xf32>
    %142 = vector.extract_strided_slice %82 {offsets = [2, 0], sizes = [8, 8], strides = [1, 1]} : vector<16x8xf32> to vector<8x8xf32>
    %143 = vector.extract_strided_slice %82 {offsets = [4, 0], sizes = [8, 8], strides = [1, 1]} : vector<16x8xf32> to vector<8x8xf32>
    %144 = vector.extract_strided_slice %82 {offsets = [6, 0], sizes = [8, 8], strides = [1, 1]} : vector<16x8xf32> to vector<8x8xf32>
    %145 = vector.extract_strided_slice %82 {offsets = [8, 0], sizes = [8, 8], strides = [1, 1]} : vector<16x8xf32> to vector<8x8xf32>
    %146 = tpu.concatenate %141, %142, %143, %144, %145 in 1 : vector<8x8xf32>, vector<8x8xf32>, vector<8x8xf32>, vector<8x8xf32>, vector<8x8xf32> -> vector<8x40xf32>
    %cst_63 = arith.constant dense<0.000000e+00> : vector<8x8xf32>
    %147 = tpu.matmul %146, %139, %cst_63 {dimension_numbers = #tpu.dot_dimension_numbers<[1], [0], [0], [1], [0, 0, 1, 1], [], []>} : vector<8x40xf32>, vector<40x8xf32>, vector<8x8xf32> -> vector<8x8xf32>
    %148 = vector.broadcast %140 : vector<1x8xf32> to vector<8x8xf32>
    %149 = arith.addf %147, %148 : vector<8x8xf32>
    %cst_64 = arith.constant 0.000000e+00 : f32
    %150 = vector.broadcast %cst_64 : f32 to vector<8x8xf32>
    %151 = arith.maximumf %149, %150 : vector<8x8xf32>
    %152 = vector.extract_strided_slice %151 {offsets = [0, 0], sizes = [4, 8], strides = [1, 1]} : vector<8x8xf32> to vector<4x8xf32>
    %cst_65 = arith.constant dense<0xFF800000> : vector<8xf32>
    %153 = vector.multi_reduction <maximumf>, %152, %cst_65 [0] : vector<4x8xf32> to vector<8xf32>
    %154 = vector.shape_cast %153 : vector<8xf32> to vector<1x8xf32>
    %155 = vector.extract_strided_slice %151 {offsets = [4, 0], sizes = [4, 8], strides = [1, 1]} : vector<8x8xf32> to vector<4x8xf32>
    %cst_66 = arith.constant dense<0xFF800000> : vector<8xf32>
    %156 = vector.multi_reduction <maximumf>, %155, %cst_66 [0] : vector<4x8xf32> to vector<8xf32>
    %157 = vector.shape_cast %156 : vector<8xf32> to vector<1x8xf32>
    %158 = tpu.concatenate %96, %99, %113, %116, %132, %135, %138, %154, %157 in 1 : vector<1x8xf32>, vector<1x8xf32>, vector<1x8xf32>, vector<1x8xf32>, vector<1x8xf32>, vector<1x8xf32>, vector<1x8xf32>, vector<1x8xf32>, vector<1x8xf32> -> vector<1x72xf32>
    %159 = tpu.concatenate %79, %158 in 0 : vector<1x72xf32>, vector<1x72xf32> -> vector<2x72xf32>
    %c0_67 = arith.constant 0 : index
    %c0_68 = arith.constant 0 : index
    %160 = vector.load %arg9[%c0_67, %c0_68] : memref<72x256xf32, #tpu.memory_space<vmem>>, vector<72x256xf32>
    %cst_69 = arith.constant dense<0.000000e+00> : vector<2x256xf32>
    %161 = tpu.matmul %159, %160, %cst_69 {dimension_numbers = #tpu.dot_dimension_numbers<[1], [0], [0], [1], [0, 0, 1, 1], [], []>} : vector<2x72xf32>, vector<72x256xf32>, vector<2x256xf32> -> vector<2x256xf32>
    %c0_70 = arith.constant 0 : index
    %c0_71 = arith.constant 0 : index
    %162 = vector.load %arg10[%c0_70, %c0_71] : memref<1x256xf32, #tpu.memory_space<vmem>>, vector<1x256xf32>
    %163 = vector.broadcast %162 : vector<1x256xf32> to vector<2x256xf32>
    %164 = arith.addf %161, %163 : vector<2x256xf32>
    %cst_72 = arith.constant 0.000000e+00 : f32
    %165 = vector.broadcast %cst_72 : f32 to vector<2x256xf32>
    %166 = arith.maximumf %164, %165 : vector<2x256xf32>
    %c0_73 = arith.constant 0 : index
    %c0_74 = arith.constant 0 : index
    %167 = vector.load %arg11[%c0_73, %c0_74] : memref<256x10xf32, #tpu.memory_space<vmem>>, vector<256x10xf32>
    %cst_75 = arith.constant dense<0.000000e+00> : vector<2x10xf32>
    %168 = tpu.matmul %166, %167, %cst_75 {dimension_numbers = #tpu.dot_dimension_numbers<[1], [0], [0], [1], [0, 0, 1, 1], [], []>} : vector<2x256xf32>, vector<256x10xf32>, vector<2x10xf32> -> vector<2x10xf32>
    %c0_76 = arith.constant 0 : index
    %c0_77 = arith.constant 0 : index
    %169 = vector.load %arg12[%c0_76, %c0_77] : memref<1x10xf32, #tpu.memory_space<vmem>>, vector<1x10xf32>
    %170 = vector.broadcast %169 : vector<1x10xf32> to vector<2x10xf32>
    %171 = arith.addf %168, %170 : vector<2x10xf32>
    %c0_78 = arith.constant 0 : index
    %c0_79 = arith.constant 0 : index
    %172 = vector.load %arg13[%c0_78, %c0_79] : memref<2x10xf32, #tpu.memory_space<vmem>>, vector<2x10xf32>
    tpu.vector_store %arg13[%c0_78, %c0_79], %171 {strides = array<i32>} : memref<2x10xf32, #tpu.memory_space<vmem>>, vector<2x10xf32>,
    return
  }
}

</mosaic_0001>

<llo_original>
// kernel: tpu_custom_call.1
$region0: #{tpu_custom_call.1}
  #allocation0 [shape = 'u32[]', space=smem, size = 0x4, offset = 0x4, fixed_abs, tag = 'smem constant byte address 0x4 - core index']
  #allocation1 [shape = 'u32[144,128]{1,0:T(1,128)}', space=vmem, size = 0x12000, scoped, tag = 'internal scratch']
  %s0 = inlined_call_operand.vmem [shape: f32[2,8,16], index: 0, kind: input, shape index: {}]
  %s1 = inlined_call_operand.vmem [shape: f32[24,8], index: 1, kind: input, shape index: {}]
  %s2 = inlined_call_operand.vmem [shape: f32[1,8], index: 2, kind: input, shape index: {}]
  %s3 = inlined_call_operand.vmem [shape: f32[24,8], index: 3, kind: input, shape index: {}]
  %s4 = inlined_call_operand.vmem [shape: f32[1,8], index: 4, kind: input, shape index: {}]
  %s5 = inlined_call_operand.vmem [shape: f32[40,8], index: 5, kind: input, shape index: {}]
  %s6 = inlined_call_operand.vmem [shape: f32[1,8], index: 6, kind: input, shape index: {}]
  %s7 = inlined_call_operand.vmem [shape: f32[40,8], index: 7, kind: input, shape index: {}]
  %s8 = inlined_call_operand.vmem [shape: f32[1,8], index: 8, kind: input, shape index: {}]
  %s9 = inlined_call_operand.vmem [shape: f32[72,256], index: 9, kind: input, shape index: {}]
  %s10 = inlined_call_operand.vmem [shape: f32[1,256], index: 10, kind: input, shape index: {}]
  %s11 = inlined_call_operand.vmem [shape: f32[256,10], index: 11, kind: input, shape index: {}]
  %s12 = inlined_call_operand.vmem [shape: f32[1,10], index: 12, kind: input, shape index: {}]
  %s13 = inlined_call_operand.hbm [shape: f32[2,10], index: 13, kind: output, shape index: {}]
  %s14 = sld [smem:[#allocation0]]
  $region62: #{tpu_custom_call.1} parent=0
    _
  %s16 = ssub.s32 1, %s14
  %s17 = scalar_select 0, %s16, %s14
  $region1: #{tpu_custom_call.1} parent=0
    #allocation2 [shape = 'u8[1024]{0}', space=vmem, size = 0x400, scoped, tag = 'output window, operand 0, single buffered']
    #allocation3 [shape = 's32[1]{0}', space=sflag, size = 0x4, scoped, tag = 'scoped memory for tpu_custom_call.1']
    %18 = vsyncpa [#allocation3], 0
    // Predicated region
    $region2: #{tpu_custom_call.1} parent=1 // pred_check
      _
    $region3: #{tpu_custom_call.1} parent=1 // pred_check_branch
      %20 = sbr.rel (0) target = $region5
    $region4: #{tpu_custom_call.1} parent=1 // pred_region
      _
    $region5: #{tpu_custom_call.1} parent=1 // pred_fallthru
      _
    // Predicated region
    $region6: #{tpu_custom_call.1} parent=1 // pred_check
      _
    $region7: #{tpu_custom_call.1} parent=1 // pred_check_branch
      %22 = sbr.rel (0) target = $region9
    $region8: #{tpu_custom_call.1} parent=1 // pred_region
      _
    $region9: #{tpu_custom_call.1} parent=1 // pred_fallthru
      _
    // Predicated region
    $region10: #{tpu_custom_call.1} parent=1 // pred_check
      _
    $region11: #{tpu_custom_call.1} parent=1 // pred_check_branch
      %24 = sbr.rel (0) target = $region13
    $region12: #{tpu_custom_call.1} parent=1 // pred_region
      _
    $region13: #{tpu_custom_call.1} parent=1 // pred_fallthru
      _
    // Predicated region
    $region14: #{tpu_custom_call.1} parent=1 // pred_check
      _
    $region15: #{tpu_custom_call.1} parent=1 // pred_check_branch
      %26 = sbr.rel (0) target = $region17
    $region16: #{tpu_custom_call.1} parent=1 // pred_region
      _
    $region17: #{tpu_custom_call.1} parent=1 // pred_fallthru
      _
    // Predicated region
    $region18: #{tpu_custom_call.1} parent=1 // pred_check
      _
    $region19: #{tpu_custom_call.1} parent=1 // pred_check_branch
      %28 = sbr.rel (0) target = $region21
    $region20: #{tpu_custom_call.1} parent=1 // pred_region
      _
    $region21: #{tpu_custom_call.1} parent=1 // pred_fallthru
      _
    // Predicated region
    $region22: #{tpu_custom_call.1} parent=1 // pred_check
      _
    $region23: #{tpu_custom_call.1} parent=1 // pred_check_branch
      %30 = sbr.rel (0) target = $region25
    $region24: #{tpu_custom_call.1} parent=1 // pred_region
      _
    $region25: #{tpu_custom_call.1} parent=1 // pred_fallthru
      _
    // Predicated region
    $region26: #{tpu_custom_call.1} parent=1 // pred_check
      _
    $region27: #{tpu_custom_call.1} parent=1 // pred_check_branch
      %32 = sbr.rel (0) target = $region29
    $region28: #{tpu_custom_call.1} parent=1 // pred_region
      _
    $region29: #{tpu_custom_call.1} parent=1 // pred_fallthru
      _
    // Predicated region
    $region30: #{tpu_custom_call.1} parent=1 // pred_check
      _
    $region31: #{tpu_custom_call.1} parent=1 // pred_check_branch
      %34 = sbr.rel (0) target = $region33
    $region32: #{tpu_custom_call.1} parent=1 // pred_region
      _
    $region33: #{tpu_custom_call.1} parent=1 // pred_fallthru
      _
    // Predicated region
    $region34: #{tpu_custom_call.1} parent=1 // pred_check
      _
    $region35: #{tpu_custom_call.1} parent=1 // pred_check_branch
      %36 = sbr.rel (0) target = $region37
    $region36: #{tpu_custom_call.1} parent=1 // pred_region
      _
    $region37: #{tpu_custom_call.1} parent=1 // pred_fallthru
      _
    // Predicated region
    $region38: #{tpu_custom_call.1} parent=1 // pred_check
      _
    $region39: #{tpu_custom_call.1} parent=1 // pred_check_branch
      %38 = sbr.rel (0) target = $region41
    $region40: #{tpu_custom_call.1} parent=1 // pred_region
      _
    $region41: #{tpu_custom_call.1} parent=1 // pred_fallthru
      _
    // Predicated region
    $region42: #{tpu_custom_call.1} parent=1 // pred_check
      _
    $region43: #{tpu_custom_call.1} parent=1 // pred_check_branch
      %40 = sbr.rel (0) target = $region45
    $region44: #{tpu_custom_call.1} parent=1 // pred_region
      _
    $region45: #{tpu_custom_call.1} parent=1 // pred_fallthru
      _
    // Predicated region
    $region46: #{tpu_custom_call.1} parent=1 // pred_check
      _
    $region47: #{tpu_custom_call.1} parent=1 // pred_check_branch
      %42 = sbr.rel (0) target = $region49
    $region48: #{tpu_custom_call.1} parent=1 // pred_region
      _
    $region49: #{tpu_custom_call.1} parent=1 // pred_fallthru
      _
    // Predicated region
    $region50: #{tpu_custom_call.1} parent=1 // pred_check
      _
    $region51: #{tpu_custom_call.1} parent=1 // pred_check_branch
      %44 = sbr.rel (0) target = $region53
    $region52: #{tpu_custom_call.1} parent=1 // pred_region
      _
    $region53: #{tpu_custom_call.1} parent=1 // pred_fallthru
      _
    %v45 = vld [vmem:[%s0] sm:$0xff]
    %v46 = vld [vmem:[%s0 + $0x8] sm:$0xff]
    %47 = vxpose.xlu0.b32.start [1/16] %v45, 128
    %48 = vxpose.xlu0.b32.cont [2/16] 0.0, 128
    %49 = vxpose.xlu0.b32.cont [3/16] 0.0, 128
    %50 = vxpose.xlu0.b32.cont [4/16] 0.0, 128
    %51 = vxpose.xlu0.b32.cont [5/16] 0.0, 128
    %52 = vxpose.xlu0.b32.cont [6/16] 0.0, 128
    %53 = vxpose.xlu0.b32.cont [7/16] 0.0, 128
    %54 = vxpose.xlu0.b32.cont [8/16] 0.0, 128
    %55 = vxpose.xlu0.b32.cont [9/16] 0.0, 128
    %56 = vxpose.xlu0.b32.cont [10/16] 0.0, 128
    %57 = vxpose.xlu0.b32.cont [11/16] 0.0, 128
    %58 = vxpose.xlu0.b32.cont [12/16] 0.0, 128
    %59 = vxpose.xlu0.b32.cont [13/16] 0.0, 128
    %60 = vxpose.xlu0.b32.cont [14/16] 0.0, 128
    %61 = vxpose.xlu0.b32.cont [15/16] 0.0, 128
    %62 = vxpose.xlu0.b32.end [16/16] 0.0, 128
    %v63 = vpop.trf.xlu0
    %v64 = vpop.trf.xlu0
    %v65 = vpop.trf.xlu0
    %v66 = vpop.trf.xlu0
    %v67 = vpop.trf.xlu0
    %v68 = vpop.trf.xlu0
    %v69 = vpop.trf.xlu0
    %v70 = vpop.trf.xlu0
    %v71 = vpop.trf.xlu0
    %v72 = vpop.trf.xlu0
    %v73 = vpop.trf.xlu0
    %v74 = vpop.trf.xlu0
    %v75 = vpop.trf.xlu0
    %v76 = vpop.trf.xlu0
    %v77 = vpop.trf.xlu0
    %v78 = vpop.trf.xlu0
    %v79 = vld [vmem:[%s1] sm:$0xff]
    %v80 = vld [vmem:[%s1 + $0x8] sm:$0xff]
    %v81 = vld [vmem:[%s1 + $0x10] sm:$0xff]
    %v82 = vld [vmem:[%s2] sm:$0x1]
    %vm85 = vcmask 1046528
    %v86 = vrot.slane %v63, 1
    %v87 = vrot.slane %v64, 1
    %v88 = vsel %vm85, %v86, %v87
    %89 = vrot.lane.b32.xlu0 %v88, 8
    %v90 = vpop.permute.xlu0 %89
    %91 = vrot.lane.b32.xlu0 %v87, 8
    %v92 = vpop.permute.xlu0 %91
    %vm95 = vcmask 1045504
    %v96 = vrot.slane %v63, 2
    %v97 = vrot.slane %v64, 2
    %v98 = vsel %vm95, %v96, %v97
    %99 = vrot.lane.b32.xlu0 %v98, 16
    %v100 = vpop.permute.xlu0 %99
    %101 = vrot.lane.b32.xlu0 %v97, 16
    %v102 = vpop.permute.xlu0 %101
    %vm105 = vcmask 64512
    %v106 = vsel %vm105, %v63, %v90
    %v107 = vsel %vm105, %v64, %v92
    %vm108 = vcmask 130048
    %v109 = vsel %vm108, %v106, %v100
    %v110 = vsel %vm108, %v107, %v102
    %v112 = vlaneseq
    %v113 = vshrl.u32 %v112, 7
    %v114 = vsub.s32 0, %v113
    %v115 = vrot.slane %v82, %v114
    %vm117 = vcmask 195584
    %v119 = vsel %vm117, %v109, 0
    %v122 = vsel %vm117, %v110, 0
    %124 = vmatprep.subr.mxu0 0.0
    %125 = vmatpush1.msra.mxu0 0.0
    %126 = vmatprep.subr.mxu0 0.0
    %127 = vmatpush1.msra.mxu0 0.0
    %128 = vmatprep.subr.mxu0 0.0
    %129 = vmatpush1.msra.mxu0 0.0
    %130 = vmatprep.subr.mxu0 0.0
    %131 = vmatpush1.msra.mxu0 0.0
    %132 = vmatprep.subr.mxu0 0.0
    %133 = vmatpush1.msra.mxu0 0.0
    %134 = vmatprep.subr.mxu0 0.0
    %135 = vmatpush1.msra.mxu0 0.0
    %136 = vmatprep.subr.mxu0 0.0
    %137 = vmatpush1.msra.mxu0 0.0
    %138 = vmatprep.subr.mxu0 0.0
    %139 = vmatpush1.msra.mxu0 0.0
    %140 = vmatprep.subr.mxu0 0.0
    %141 = vmatpush1.msra.mxu0 0.0
    %142 = vmatprep.subr.mxu0 0.0
    %143 = vmatpush1.msra.mxu0 0.0
    %144 = vmatprep.subr.mxu0 0.0
    %145 = vmatpush1.msra.mxu0 0.0
    %146 = vmatprep.subr.mxu0 0.0
    %147 = vmatpush1.msra.mxu0 0.0
    %148 = vmatprep.subr.mxu0 0.0
    %149 = vmatpush1.msra.mxu0 0.0
    %150 = vmatprep.subr.mxu0 0.0
    %151 = vmatpush1.msra.mxu0 %v81
    %152 = vmatprep.subr.mxu0 0.0
    %153 = vmatpush1.msra.mxu0 %v80
    %154 = vmatprep.subr.mxu0 0.0
    %155 = vmatpush1.msra.mxu0 %v79
    %156 = vmatprep.subr.mxu0 0.0
    %157 = vmatpush2.msra.mxu0 0.0
    %158 = vmatprep.subr.mxu0 0.0
    %159 = vmatpush2.msra.mxu0 0.0
    %160 = vmatprep.subr.mxu0 0.0
    %161 = vmatpush2.msra.mxu0 0.0
    %162 = vmatprep.subr.mxu0 0.0
    %163 = vmatpush2.msra.mxu0 0.0
    %164 = vmatprep.subr.mxu0 0.0
    %165 = vmatpush2.msra.mxu0 0.0
    %166 = vmatprep.subr.mxu0 0.0
    %167 = vmatpush2.msra.mxu0 0.0
    %168 = vmatprep.subr.mxu0 0.0
    %169 = vmatpush2.msra.mxu0 0.0
    %170 = vmatprep.subr.mxu0 0.0
    %171 = vmatpush2.msra.mxu0 0.0
    %172 = vmatprep.subr.mxu0 0.0
    %173 = vmatpush2.msra.mxu0 0.0
    %174 = vmatprep.subr.mxu0 0.0
    %175 = vmatpush2.msra.mxu0 0.0
    %176 = vmatprep.subr.mxu0 0.0
    %177 = vmatpush2.msra.mxu0 0.0
    %178 = vmatprep.subr.mxu0 0.0
    %179 = vmatpush2.msra.mxu0 0.0
    %180 = vmatprep.subr.mxu0 0.0
    %181 = vmatpush2.msra.mxu0 0.0
    %182 = vmatprep.subr.mxu0 0.0
    %183 = vmatpush2.msra.mxu0 0.0
    %184 = vmatprep.subr.mxu0 0.0
    %185 = vmatpush2.msra.mxu0 0.0
    %186 = vmatprep.subr.mxu0 0.0
    %187 = vmatpush2.msra.mxu0 0.0
    %188 = vmatprep.mubr.f32.mxu0 0.0
    %189 = vmatmul.mubr.f32.gmra.mxu0 %v119
    %v190 = vpop.f32.mrf.mxu0
    %v191 = vadd.f32 %v115, %v190
    %v192 = vpop.f32.mrf.mxu0
    %193 = vmatprep.mubr.f32.mxu0 0.0
    %194 = vmatmul.mubr.f32.gmra.mxu0 %v122
    %v195 = vpop.f32.mrf.mxu0
    %v196 = vadd.f32 %v115, %v195
    %v197 = vpop.f32.mrf.mxu0
    %198 = vdwg.mxu0
    %v199 = vmax.f32 %v191, 0.0
    %v200 = vmax.f32 %v196, 0.0
    %vm201 = vcmask 62464
    %v202 = vsel %vm201, %v199, -inf
    %v203 = vrot.slane %v202, 4
    %v204 = vmax.f32 %v202, %v203
    %v205 = vrot.slane %v204, 2
    %v206 = vmax.f32 %v204, %v205
    %v207 = vrot.slane %v206, 1
    %v208 = vmax.f32 %v206, %v207
    %vm209 = vcmask 64518
    %v210 = vsel %vm209, %v199, -inf
    %vm211 = vcmask 60416
    %v212 = vsel %vm211, %v200, -inf
    %v213 = vmax.f32 %v210, %v212
    %v214 = vrot.slane %v213, 4
    %v215 = vmax.f32 %v213, %v214
    %v216 = vrot.slane %v215, 2
    %v217 = vmax.f32 %v215, %v216
    %v218 = vrot.slane %v217, 1
    %v219 = vmax.f32 %v217, %v218
    %v220 = vld [vmem:[%s3] sm:$0xff]
    %v221 = vld [vmem:[%s3 + $0x8] sm:$0xff]
    %v222 = vld [vmem:[%s3 + $0x10] sm:$0xff]
    %v223 = vld [vmem:[%s4] sm:$0x1]
    %224 = vrot.lane.b32.xlu0 %v98, 8
    %v225 = vpop.permute.xlu0 %224
    %226 = vrot.lane.b32.xlu0 %v97, 8
    %v227 = vpop.permute.xlu0 %226
    %vm230 = vcmask 1043456
    %v231 = vrot.slane %v63, 4
    %v232 = vrot.slane %v64, 4
    %v233 = vsel %vm230, %v231, %v232
    %234 = vrot.lane.b32.xlu0 %v233, 16
    %v235 = vpop.permute.xlu0 %234
    %236 = vrot.lane.b32.xlu0 %v232, 16
    %v237 = vpop.permute.xlu0 %236
    %v240 = vsel %vm105, %v63, %v225
    %v241 = vsel %vm105, %v64, %v227
    %v242 = vsel %vm108, %v240, %v235
    %v243 = vsel %vm108, %v241, %v237
    %v245 = vlaneseq
    %v246 = vshrl.u32 %v245, 7
    %v247 = vsub.s32 0, %v246
    %v248 = vrot.slane %v223, %v247
    %v251 = vsel %vm117, %v242, 0
    %v254 = vsel %vm117, %v243, 0
    %256 = vmatprep.subr.mxu0 0.0
    %257 = vmatpush1.msra.mxu0 0.0
    %258 = vmatprep.subr.mxu0 0.0
    %259 = vmatpush1.msra.mxu0 0.0
    %260 = vmatprep.subr.mxu0 0.0
    %261 = vmatpush1.msra.mxu0 0.0
    %262 = vmatprep.subr.mxu0 0.0
    %263 = vmatpush1.msra.mxu0 0.0
    %264 = vmatprep.subr.mxu0 0.0
    %265 = vmatpush1.msra.mxu0 0.0
    %266 = vmatprep.subr.mxu0 0.0
    %267 = vmatpush1.msra.mxu0 0.0
    %268 = vmatprep.subr.mxu0 0.0
    %269 = vmatpush1.msra.mxu0 0.0
    %270 = vmatprep.subr.mxu0 0.0
    %271 = vmatpush1.msra.mxu0 0.0
    %272 = vmatprep.subr.mxu0 0.0
    %273 = vmatpush1.msra.mxu0 0.0
    %274 = vmatprep.subr.mxu0 0.0
    %275 = vmatpush1.msra.mxu0 0.0
    %276 = vmatprep.subr.mxu0 0.0
    %277 = vmatpush1.msra.mxu0 0.0
    %278 = vmatprep.subr.mxu0 0.0
    %279 = vmatpush1.msra.mxu0 0.0
    %280 = vmatprep.subr.mxu0 0.0
    %281 = vmatpush1.msra.mxu0 0.0
    %282 = vmatprep.subr.mxu0 0.0
    %283 = vmatpush1.msra.mxu0 %v222
    %284 = vmatprep.subr.mxu0 0.0
    %285 = vmatpush1.msra.mxu0 %v221
    %286 = vmatprep.subr.mxu0 0.0
    %287 = vmatpush1.msra.mxu0 %v220
    %288 = vmatprep.subr.mxu0 0.0
    %289 = vmatpush2.msra.mxu0 0.0
    %290 = vmatprep.subr.mxu0 0.0
    %291 = vmatpush2.msra.mxu0 0.0
    %292 = vmatprep.subr.mxu0 0.0
    %293 = vmatpush2.msra.mxu0 0.0
    %294 = vmatprep.subr.mxu0 0.0
    %295 = vmatpush2.msra.mxu0 0.0
    %296 = vmatprep.subr.mxu0 0.0
    %297 = vmatpush2.msra.mxu0 0.0
    %298 = vmatprep.subr.mxu0 0.0
    %299 = vmatpush2.msra.mxu0 0.0
    %300 = vmatprep.subr.mxu0 0.0
    %301 = vmatpush2.msra.mxu0 0.0
    %302 = vmatprep.subr.mxu0 0.0
    %303 = vmatpush2.msra.mxu0 0.0
    %304 = vmatprep.subr.mxu0 0.0
    %305 = vmatpush2.msra.mxu0 0.0
    %306 = vmatprep.subr.mxu0 0.0
    %307 = vmatpush2.msra.mxu0 0.0
    %308 = vmatprep.subr.mxu0 0.0
    %309 = vmatpush2.msra.mxu0 0.0
    %310 = vmatprep.subr.mxu0 0.0
    %311 = vmatpush2.msra.mxu0 0.0
    %312 = vmatprep.subr.mxu0 0.0
    %313 = vmatpush2.msra.mxu0 0.0
    %314 = vmatprep.subr.mxu0 0.0
    %315 = vmatpush2.msra.mxu0 0.0
    %316 = vmatprep.subr.mxu0 0.0
    %317 = vmatpush2.msra.mxu0 0.0
    %318 = vmatprep.subr.mxu0 0.0
    %319 = vmatpush2.msra.mxu0 0.0
    %320 = vmatprep.mubr.f32.mxu0 0.0
    %321 = vmatmul.mubr.f32.gmra.mxu0 %v251
    %v322 = vpop.f32.mrf.mxu0
    %v323 = vadd.f32 %v248, %v322
    %v324 = vpop.f32.mrf.mxu0
    %325 = vmatprep.mubr.f32.mxu0 0.0
    %326 = vmatmul.mubr.f32.gmra.mxu0 %v254
    %v327 = vpop.f32.mrf.mxu0
    %v328 = vadd.f32 %v248, %v327
    %v329 = vpop.f32.mrf.mxu0
    %330 = vdwg.mxu0
    %v331 = vmax.f32 %v323, 0.0
    %v332 = vmax.f32 %v328, 0.0
    %v333 = vsel %vm201, %v331, -inf
    %v334 = vrot.slane %v333, 4
    %v335 = vmax.f32 %v333, %v334
    %v336 = vrot.slane %v335, 2
    %v337 = vmax.f32 %v335, %v336
    %v338 = vrot.slane %v337, 1
    %v339 = vmax.f32 %v337, %v338
    %v340 = vsel %vm209, %v331, -inf
    %v341 = vsel %vm211, %v332, -inf
    %v342 = vmax.f32 %v340, %v341
    %v343 = vrot.slane %v342, 4
    %v344 = vmax.f32 %v342, %v343
    %v345 = vrot.slane %v344, 2
    %v346 = vmax.f32 %v344, %v345
    %v347 = vrot.slane %v346, 1
    %v348 = vmax.f32 %v346, %v347
    %v349 = vld [vmem:[%s5] sm:$0xff]
    %v350 = vld [vmem:[%s5 + $0x8] sm:$0xff]
    %v351 = vld [vmem:[%s5 + $0x10] sm:$0xff]
    %v352 = vld [vmem:[%s5 + $0x18] sm:$0xff]
    %v353 = vld [vmem:[%s5 + $0x20] sm:$0xff]
    %v354 = vld [vmem:[%s6] sm:$0x1]
    %vm355 = vcmask 1044480
    %v356 = vrot.slane %v63, 3
    %v357 = vrot.slane %v64, 3
    %v358 = vsel %vm355, %v356, %v357
    %359 = vrot.lane.b32.xlu0 %v358, 24
    %v360 = vpop.permute.xlu0 %359
    %361 = vrot.lane.b32.xlu0 %v357, 24
    %v362 = vpop.permute.xlu0 %361
    %365 = vrot.lane.b32.xlu0 %v233, 32
    %v366 = vpop.permute.xlu0 %365
    %367 = vrot.lane.b32.xlu0 %v232, 32
    %v368 = vpop.permute.xlu0 %367
    %v371 = vsel %vm117, %v109, %v360
    %v372 = vsel %vm117, %v110, %v362
    %vm373 = vcmask 261120
    %v374 = vsel %vm373, %v371, %v366
    %v375 = vsel %vm373, %v372, %v368
    %v377 = vlaneseq
    %v378 = vshrl.u32 %v377, 7
    %v379 = vsub.s32 0, %v378
    %v380 = vrot.slane %v354, %v379
    %vm382 = vcmask 326656
    %v384 = vsel %vm382, %v374, 0
    %v387 = vsel %vm382, %v375, 0
    %389 = vmatprep.subr.mxu0 0.0
    %390 = vmatpush1.msra.mxu0 0.0
    %391 = vmatprep.subr.mxu0 0.0
    %392 = vmatpush1.msra.mxu0 0.0
    %393 = vmatprep.subr.mxu0 0.0
    %394 = vmatpush1.msra.mxu0 0.0
    %395 = vmatprep.subr.mxu0 0.0
    %396 = vmatpush1.msra.mxu0 0.0
    %397 = vmatprep.subr.mxu0 0.0
    %398 = vmatpush1.msra.mxu0 0.0
    %399 = vmatprep.subr.mxu0 0.0
    %400 = vmatpush1.msra.mxu0 0.0
    %401 = vmatprep.subr.mxu0 0.0
    %402 = vmatpush1.msra.mxu0 0.0
    %403 = vmatprep.subr.mxu0 0.0
    %404 = vmatpush1.msra.mxu0 0.0
    %405 = vmatprep.subr.mxu0 0.0
    %406 = vmatpush1.msra.mxu0 0.0
    %407 = vmatprep.subr.mxu0 0.0
    %408 = vmatpush1.msra.mxu0 0.0
    %409 = vmatprep.subr.mxu0 0.0
    %410 = vmatpush1.msra.mxu0 0.0
    %411 = vmatprep.subr.mxu0 0.0
    %412 = vmatpush1.msra.mxu0 %v353
    %413 = vmatprep.subr.mxu0 0.0
    %414 = vmatpush1.msra.mxu0 %v352
    %415 = vmatprep.subr.mxu0 0.0
    %416 = vmatpush1.msra.mxu0 %v351
    %417 = vmatprep.subr.mxu0 0.0
    %418 = vmatpush1.msra.mxu0 %v350
    %419 = vmatprep.subr.mxu0 0.0
    %420 = vmatpush1.msra.mxu0 %v349
    %421 = vmatprep.subr.mxu0 0.0
    %422 = vmatpush2.msra.mxu0 0.0
    %423 = vmatprep.subr.mxu0 0.0
    %424 = vmatpush2.msra.mxu0 0.0
    %425 = vmatprep.subr.mxu0 0.0
    %426 = vmatpush2.msra.mxu0 0.0
    %427 = vmatprep.subr.mxu0 0.0
    %428 = vmatpush2.msra.mxu0 0.0
    %429 = vmatprep.subr.mxu0 0.0
    %430 = vmatpush2.msra.mxu0 0.0
    %431 = vmatprep.subr.mxu0 0.0
    %432 = vmatpush2.msra.mxu0 0.0
    %433 = vmatprep.subr.mxu0 0.0
    %434 = vmatpush2.msra.mxu0 0.0
    %435 = vmatprep.subr.mxu0 0.0
    %436 = vmatpush2.msra.mxu0 0.0
    %437 = vmatprep.subr.mxu0 0.0
    %438 = vmatpush2.msra.mxu0 0.0
    %439 = vmatprep.subr.mxu0 0.0
    %440 = vmatpush2.msra.mxu0 0.0
    %441 = vmatprep.subr.mxu0 0.0
    %442 = vmatpush2.msra.mxu0 0.0
    %443 = vmatprep.subr.mxu0 0.0
    %444 = vmatpush2.msra.mxu0 0.0
    %445 = vmatprep.subr.mxu0 0.0
    %446 = vmatpush2.msra.mxu0 0.0
    %447 = vmatprep.subr.mxu0 0.0
    %448 = vmatpush2.msra.mxu0 0.0
    %449 = vmatprep.subr.mxu0 0.0
    %450 = vmatpush2.msra.mxu0 0.0
    %451 = vmatprep.subr.mxu0 0.0
    %452 = vmatpush2.msra.mxu0 0.0
    %453 = vmatprep.mubr.f32.mxu0 0.0
    %454 = vmatmul.mubr.f32.gmra.mxu0 %v384
    %v455 = vpop.f32.mrf.mxu0
    %v456 = vadd.f32 %v380, %v455
    %v457 = vpop.f32.mrf.mxu0
    %458 = vmatprep.mubr.f32.mxu0 0.0
    %459 = vmatmul.mubr.f32.gmra.mxu0 %v387
    %v460 = vpop.f32.mrf.mxu0
    %v461 = vadd.f32 %v380, %v460
    %v462 = vpop.f32.mrf.mxu0
    %463 = vdwg.mxu0
    %v464 = vmax.f32 %v456, 0.0
    %v465 = vmax.f32 %v461, 0.0
    %v466 = vsel %vm211, %v464, -inf
    %v467 = vrot.slane %v466, 4
    %v468 = vmax.f32 %v466, %v467
    %v469 = vrot.slane %v468, 2
    %v470 = vmax.f32 %v468, %v469
    %v471 = vrot.slane %v470, 1
    %v472 = vmax.f32 %v470, %v471
    %vm473 = vcmask 64516
    %v474 = vsel %vm473, %v464, -inf
    %v475 = vrot.slane %v474, 4
    %v476 = vmax.f32 %v474, %v475
    %v477 = vrot.slane %v476, 2
    %v478 = vmax.f32 %v476, %v477
    %v479 = vrot.slane %v478, 1
    %v480 = vmax.f32 %v478, %v479
    %v481 = vsel %vm211, %v465, -inf
    %v482 = vrot.slane %v481, 4
    %v483 = vmax.f32 %v481, %v482
    %v484 = vrot.slane %v483, 2
    %v485 = vmax.f32 %v483, %v484
    %v486 = vrot.slane %v485, 1
    %v487 = vmax.f32 %v485, %v486
    %v488 = vld [vmem:[%s7] sm:$0xff]
    %v489 = vld [vmem:[%s7 + $0x8] sm:$0xff]
    %v490 = vld [vmem:[%s7 + $0x10] sm:$0xff]
    %v491 = vld [vmem:[%s7 + $0x18] sm:$0xff]
    %v492 = vld [vmem:[%s7 + $0x20] sm:$0xff]
    %v493 = vld [vmem:[%s8] sm:$0x1]
    %vm494 = vcmask 1041408
    %v495 = vrot.slane %v63, 6
    %v496 = vrot.slane %v64, 6
    %v497 = vsel %vm494, %v495, %v496
    %498 = vrot.lane.b32.xlu0 %v497, 24
    %v499 = vpop.permute.xlu0 %498
    %501 = vrot.lane.b32.xlu0 %v64, 32
    %v502 = vpop.permute.xlu0 %501
    %v504 = vsel %vm117, %v242, %v499
    %v505 = vsel %vm373, %v504, %v502
    %v507 = vlaneseq
    %v508 = vshrl.u32 %v507, 7
    %v509 = vsub.s32 0, %v508
    %v510 = vrot.slane %v493, %v509
    %v513 = vsel %vm382, %v505, 0
    %515 = vmatprep.subr.mxu0 0.0
    %516 = vmatpush1.msra.mxu0 0.0
    %517 = vmatprep.subr.mxu0 0.0
    %518 = vmatpush1.msra.mxu0 0.0
    %519 = vmatprep.subr.mxu0 0.0
    %520 = vmatpush1.msra.mxu0 0.0
    %521 = vmatprep.subr.mxu0 0.0
    %522 = vmatpush1.msra.mxu0 0.0
    %523 = vmatprep.subr.mxu0 0.0
    %524 = vmatpush1.msra.mxu0 0.0
    %525 = vmatprep.subr.mxu0 0.0
    %526 = vmatpush1.msra.mxu0 0.0
    %527 = vmatprep.subr.mxu0 0.0
    %528 = vmatpush1.msra.mxu0 0.0
    %529 = vmatprep.subr.mxu0 0.0
    %530 = vmatpush1.msra.mxu0 0.0
    %531 = vmatprep.subr.mxu0 0.0
    %532 = vmatpush1.msra.mxu0 0.0
    %533 = vmatprep.subr.mxu0 0.0
    %534 = vmatpush1.msra.mxu0 0.0
    %535 = vmatprep.subr.mxu0 0.0
    %536 = vmatpush1.msra.mxu0 0.0
    %537 = vmatprep.subr.mxu0 0.0
    %538 = vmatpush1.msra.mxu0 %v492
    %539 = vmatprep.subr.mxu0 0.0
    %540 = vmatpush1.msra.mxu0 %v491
    %541 = vmatprep.subr.mxu0 0.0
    %542 = vmatpush1.msra.mxu0 %v490
    %543 = vmatprep.subr.mxu0 0.0
    %544 = vmatpush1.msra.mxu0 %v489
    %545 = vmatprep.subr.mxu0 0.0
    %546 = vmatpush1.msra.mxu0 %v488
    %547 = vmatprep.subr.mxu0 0.0
    %548 = vmatpush2.msra.mxu0 0.0
    %549 = vmatprep.subr.mxu0 0.0
    %550 = vmatpush2.msra.mxu0 0.0
    %551 = vmatprep.subr.mxu0 0.0
    %552 = vmatpush2.msra.mxu0 0.0
    %553 = vmatprep.subr.mxu0 0.0
    %554 = vmatpush2.msra.mxu0 0.0
    %555 = vmatprep.subr.mxu0 0.0
    %556 = vmatpush2.msra.mxu0 0.0
    %557 = vmatprep.subr.mxu0 0.0
    %558 = vmatpush2.msra.mxu0 0.0
    %559 = vmatprep.subr.mxu0 0.0
    %560 = vmatpush2.msra.mxu0 0.0
    %561 = vmatprep.subr.mxu0 0.0
    %562 = vmatpush2.msra.mxu0 0.0
    %563 = vmatprep.subr.mxu0 0.0
    %564 = vmatpush2.msra.mxu0 0.0
    %565 = vmatprep.subr.mxu0 0.0
    %566 = vmatpush2.msra.mxu0 0.0
    %567 = vmatprep.subr.mxu0 0.0
    %568 = vmatpush2.msra.mxu0 0.0
    %569 = vmatprep.subr.mxu0 0.0
    %570 = vmatpush2.msra.mxu0 0.0
    %571 = vmatprep.subr.mxu0 0.0
    %572 = vmatpush2.msra.mxu0 0.0
    %573 = vmatprep.subr.mxu0 0.0
    %574 = vmatpush2.msra.mxu0 0.0
    %575 = vmatprep.subr.mxu0 0.0
    %576 = vmatpush2.msra.mxu0 0.0
    %577 = vmatprep.subr.mxu0 0.0
    %578 = vmatpush2.msra.mxu0 0.0
    %579 = vmatprep.mubr.f32.mxu0 0.0
    %580 = vmatmul.mubr.f32.gmra.mxu0 %v513
    %v581 = vpop.f32.mrf.mxu0
    %v582 = vadd.f32 %v510, %v581
    %v583 = vpop.f32.mrf.mxu0
    %584 = vdwg.mxu0
    %v585 = vmax.f32 %v582, 0.0
    %v586 = vsel %vm211, %v585, -inf
    %v587 = vrot.slane %v586, 4
    %v588 = vmax.f32 %v586, %v587
    %v589 = vrot.slane %v588, 2
    %v590 = vmax.f32 %v588, %v589
    %v591 = vrot.slane %v590, 1
    %v592 = vmax.f32 %v590, %v591
    %v593 = vsel %vm473, %v585, -inf
    %v594 = vrot.slane %v593, 4
    %v595 = vmax.f32 %v593, %v594
    %v596 = vrot.slane %v595, 2
    %v597 = vmax.f32 %v595, %v596
    %v598 = vrot.slane %v597, 1
    %v599 = vmax.f32 %v597, %v598
    %601 = vrot.lane.b32.xlu0 %v219, 8
    %v602 = vpop.permute.xlu0 %601
    %605 = vrot.lane.b32.xlu0 %v339, 16
    %v606 = vpop.permute.xlu0 %605
    %609 = vrot.lane.b32.xlu0 %v348, 24
    %v610 = vpop.permute.xlu0 %609
    %613 = vrot.lane.b32.xlu0 %v472, 32
    %v614 = vpop.permute.xlu0 %613
    %617 = vrot.lane.b32.xlu0 %v480, 40
    %v618 = vpop.permute.xlu0 %617
    %621 = vrot.lane.b32.xlu0 %v487, 48
    %v622 = vpop.permute.xlu0 %621
    %625 = vrot.lane.b32.xlu0 %v592, 56
    %v626 = vpop.permute.xlu0 %625
    %629 = vrot.lane.b32.xlu0 %v599, 64
    %v630 = vpop.permute.xlu0 %629
    %v632 = vsel %vm105, %v208, %v602
    %v633 = vsel %vm108, %v632, %v606
    %v634 = vsel %vm117, %v633, %v610
    %v635 = vsel %vm373, %v634, %v614
    %v636 = vsel %vm382, %v635, %v618
    %vm637 = vcmask 392192
    %v638 = vsel %vm637, %v636, %v622
    %vm639 = vcmask 457728
    %v640 = vsel %vm639, %v638, %v626
    %vm641 = vcmask 523264
    %v642 = vsel %vm641, %v640, %v630
    %643 = vxpose.xlu0.b32.start [1/16] %v46, 128
    %644 = vxpose.xlu0.b32.cont [2/16] 0.0, 128
    %645 = vxpose.xlu0.b32.cont [3/16] 0.0, 128
    %646 = vxpose.xlu0.b32.cont [4/16] 0.0, 128
    %647 = vxpose.xlu0.b32.cont [5/16] 0.0, 128
    %648 = vxpose.xlu0.b32.cont [6/16] 0.0, 128
    %649 = vxpose.xlu0.b32.cont [7/16] 0.0, 128
    %650 = vxpose.xlu0.b32.cont [8/16] 0.0, 128
    %651 = vxpose.xlu0.b32.cont [9/16] 0.0, 128
    %652 = vxpose.xlu0.b32.cont [10/16] 0.0, 128
    %653 = vxpose.xlu0.b32.cont [11/16] 0.0, 128
    %654 = vxpose.xlu0.b32.cont [12/16] 0.0, 128
    %655 = vxpose.xlu0.b32.cont [13/16] 0.0, 128
    %656 = vxpose.xlu0.b32.cont [14/16] 0.0, 128
    %657 = vxpose.xlu0.b32.cont [15/16] 0.0, 128
    %658 = vxpose.xlu0.b32.end [16/16] 0.0, 128
    %v659 = vpop.trf.xlu0
    %v660 = vpop.trf.xlu0
    %v661 = vpop.trf.xlu0
    %v662 = vpop.trf.xlu0
    %v663 = vpop.trf.xlu0
    %v664 = vpop.trf.xlu0
    %v665 = vpop.trf.xlu0
    %v666 = vpop.trf.xlu0
    %v667 = vpop.trf.xlu0
    %v668 = vpop.trf.xlu0
    %v669 = vpop.trf.xlu0
    %v670 = vpop.trf.xlu0
    %v671 = vpop.trf.xlu0
    %v672 = vpop.trf.xlu0
    %v673 = vpop.trf.xlu0
    %v674 = vpop.trf.xlu0
    %v677 = vrot.slane %v659, 1
    %v678 = vrot.slane %v660, 1
    %v679 = vsel %vm85, %v677, %v678
    %680 = vrot.lane.b32.xlu0 %v679, 8
    %v681 = vpop.permute.xlu0 %680
    %682 = vrot.lane.b32.xlu0 %v678, 8
    %v683 = vpop.permute.xlu0 %682
    %v686 = vrot.slane %v659, 2
    %v687 = vrot.slane %v660, 2
    %v688 = vsel %vm95, %v686, %v687
    %689 = vrot.lane.b32.xlu0 %v688, 16
    %v690 = vpop.permute.xlu0 %689
    %691 = vrot.lane.b32.xlu0 %v687, 16
    %v692 = vpop.permute.xlu0 %691
    %v695 = vsel %vm105, %v659, %v681
    %v696 = vsel %vm105, %v660, %v683
    %v697 = vsel %vm108, %v695, %v690
    %v698 = vsel %vm108, %v696, %v692
    %v700 = vsel %vm117, %v697, 0
    %v703 = vsel %vm117, %v698, 0
    %705 = vmatprep.subr.mxu0 0.0
    %706 = vmatpush1.msra.mxu0 0.0
    %707 = vmatprep.subr.mxu0 0.0
    %708 = vmatpush1.msra.mxu0 0.0
    %709 = vmatprep.subr.mxu0 0.0
    %710 = vmatpush1.msra.mxu0 0.0
    %711 = vmatprep.subr.mxu0 0.0
    %712 = vmatpush1.msra.mxu0 0.0
    %713 = vmatprep.subr.mxu0 0.0
    %714 = vmatpush1.msra.mxu0 0.0
    %715 = vmatprep.subr.mxu0 0.0
    %716 = vmatpush1.msra.mxu0 0.0
    %717 = vmatprep.subr.mxu0 0.0
    %718 = vmatpush1.msra.mxu0 0.0
    %719 = vmatprep.subr.mxu0 0.0
    %720 = vmatpush1.msra.mxu0 0.0
    %721 = vmatprep.subr.mxu0 0.0
    %722 = vmatpush1.msra.mxu0 0.0
    %723 = vmatprep.subr.mxu0 0.0
    %724 = vmatpush1.msra.mxu0 0.0
    %725 = vmatprep.subr.mxu0 0.0
    %726 = vmatpush1.msra.mxu0 0.0
    %727 = vmatprep.subr.mxu0 0.0
    %728 = vmatpush1.msra.mxu0 0.0
    %729 = vmatprep.subr.mxu0 0.0
    %730 = vmatpush1.msra.mxu0 0.0
    %731 = vmatprep.subr.mxu0 0.0
    %732 = vmatpush1.msra.mxu0 %v81
    %733 = vmatprep.subr.mxu0 0.0
    %734 = vmatpush1.msra.mxu0 %v80
    %735 = vmatprep.subr.mxu0 0.0
    %736 = vmatpush1.msra.mxu0 %v79
    %737 = vmatprep.subr.mxu0 0.0
    %738 = vmatpush2.msra.mxu0 0.0
    %739 = vmatprep.subr.mxu0 0.0
    %740 = vmatpush2.msra.mxu0 0.0
    %741 = vmatprep.subr.mxu0 0.0
    %742 = vmatpush2.msra.mxu0 0.0
    %743 = vmatprep.subr.mxu0 0.0
    %744 = vmatpush2.msra.mxu0 0.0
    %745 = vmatprep.subr.mxu0 0.0
    %746 = vmatpush2.msra.mxu0 0.0
    %747 = vmatprep.subr.mxu0 0.0
    %748 = vmatpush2.msra.mxu0 0.0
    %749 = vmatprep.subr.mxu0 0.0
    %750 = vmatpush2.msra.mxu0 0.0
    %751 = vmatprep.subr.mxu0 0.0
    %752 = vmatpush2.msra.mxu0 0.0
    %753 = vmatprep.subr.mxu0 0.0
    %754 = vmatpush2.msra.mxu0 0.0
    %755 = vmatprep.subr.mxu0 0.0
    %756 = vmatpush2.msra.mxu0 0.0
    %757 = vmatprep.subr.mxu0 0.0
    %758 = vmatpush2.msra.mxu0 0.0
    %759 = vmatprep.subr.mxu0 0.0
    %760 = vmatpush2.msra.mxu0 0.0
    %761 = vmatprep.subr.mxu0 0.0
    %762 = vmatpush2.msra.mxu0 0.0
    %763 = vmatprep.subr.mxu0 0.0
    %764 = vmatpush2.msra.mxu0 0.0
    %765 = vmatprep.subr.mxu0 0.0
    %766 = vmatpush2.msra.mxu0 0.0
    %767 = vmatprep.subr.mxu0 0.0
    %768 = vmatpush2.msra.mxu0 0.0
    %769 = vmatprep.mubr.f32.mxu0 0.0
    %770 = vmatmul.mubr.f32.gmra.mxu0 %v700
    %v771 = vpop.f32.mrf.mxu0
    %v772 = vadd.f32 %v115, %v771
    %v773 = vpop.f32.mrf.mxu0
    %774 = vmatprep.mubr.f32.mxu0 0.0
    %775 = vmatmul.mubr.f32.gmra.mxu0 %v703
    %v776 = vpop.f32.mrf.mxu0
    %v777 = vadd.f32 %v115, %v776
    %v778 = vpop.f32.mrf.mxu0
    %779 = vdwg.mxu0
    %v780 = vmax.f32 %v772, 0.0
    %v781 = vmax.f32 %v777, 0.0
    %v782 = vsel %vm201, %v780, -inf
    %v783 = vrot.slane %v782, 4
    %v784 = vmax.f32 %v782, %v783
    %v785 = vrot.slane %v784, 2
    %v786 = vmax.f32 %v784, %v785
    %v787 = vrot.slane %v786, 1
    %v788 = vmax.f32 %v786, %v787
    %v789 = vsel %vm209, %v780, -inf
    %v790 = vsel %vm211, %v781, -inf
    %v791 = vmax.f32 %v789, %v790
    %v792 = vrot.slane %v791, 4
    %v793 = vmax.f32 %v791, %v792
    %v794 = vrot.slane %v793, 2
    %v795 = vmax.f32 %v793, %v794
    %v796 = vrot.slane %v795, 1
    %v797 = vmax.f32 %v795, %v796
    %798 = vrot.lane.b32.xlu0 %v688, 8
    %v799 = vpop.permute.xlu0 %798
    %800 = vrot.lane.b32.xlu0 %v687, 8
    %v801 = vpop.permute.xlu0 %800
    %v804 = vrot.slane %v659, 4
    %v805 = vrot.slane %v660, 4
    %v806 = vsel %vm230, %v804, %v805
    %807 = vrot.lane.b32.xlu0 %v806, 16
    %v808 = vpop.permute.xlu0 %807
    %809 = vrot.lane.b32.xlu0 %v805, 16
    %v810 = vpop.permute.xlu0 %809
    %v813 = vsel %vm105, %v659, %v799
    %v814 = vsel %vm105, %v660, %v801
    %v815 = vsel %vm108, %v813, %v808
    %v816 = vsel %vm108, %v814, %v810
    %v818 = vsel %vm117, %v815, 0
    %v821 = vsel %vm117, %v816, 0
    %823 = vmatprep.subr.mxu0 0.0
    %824 = vmatpush1.msra.mxu0 0.0
    %825 = vmatprep.subr.mxu0 0.0
    %826 = vmatpush1.msra.mxu0 0.0
    %827 = vmatprep.subr.mxu0 0.0
    %828 = vmatpush1.msra.mxu0 0.0
    %829 = vmatprep.subr.mxu0 0.0
    %830 = vmatpush1.msra.mxu0 0.0
    %831 = vmatprep.subr.mxu0 0.0
    %832 = vmatpush1.msra.mxu0 0.0
    %833 = vmatprep.subr.mxu0 0.0
    %834 = vmatpush1.msra.mxu0 0.0
    %835 = vmatprep.subr.mxu0 0.0
    %836 = vmatpush1.msra.mxu0 0.0
    %837 = vmatprep.subr.mxu0 0.0
    %838 = vmatpush1.msra.mxu0 0.0
    %839 = vmatprep.subr.mxu0 0.0
    %840 = vmatpush1.msra.mxu0 0.0
    %841 = vmatprep.subr.mxu0 0.0
    %842 = vmatpush1.msra.mxu0 0.0
    %843 = vmatprep.subr.mxu0 0.0
    %844 = vmatpush1.msra.mxu0 0.0
    %845 = vmatprep.subr.mxu0 0.0
    %846 = vmatpush1.msra.mxu0 0.0
    %847 = vmatprep.subr.mxu0 0.0
    %848 = vmatpush1.msra.mxu0 0.0
    %849 = vmatprep.subr.mxu0 0.0
    %850 = vmatpush1.msra.mxu0 %v222
    %851 = vmatprep.subr.mxu0 0.0
    %852 = vmatpush1.msra.mxu0 %v221
    %853 = vmatprep.subr.mxu0 0.0
    %854 = vmatpush1.msra.mxu0 %v220
    %855 = vmatprep.subr.mxu0 0.0
    %856 = vmatpush2.msra.mxu0 0.0
    %857 = vmatprep.subr.mxu0 0.0
    %858 = vmatpush2.msra.mxu0 0.0
    %859 = vmatprep.subr.mxu0 0.0
    %860 = vmatpush2.msra.mxu0 0.0
    %861 = vmatprep.subr.mxu0 0.0
    %862 = vmatpush2.msra.mxu0 0.0
    %863 = vmatprep.subr.mxu0 0.0
    %864 = vmatpush2.msra.mxu0 0.0
    %865 = vmatprep.subr.mxu0 0.0
    %866 = vmatpush2.msra.mxu0 0.0
    %867 = vmatprep.subr.mxu0 0.0
    %868 = vmatpush2.msra.mxu0 0.0
    %869 = vmatprep.subr.mxu0 0.0
    %870 = vmatpush2.msra.mxu0 0.0
    %871 = vmatprep.subr.mxu0 0.0
    %872 = vmatpush2.msra.mxu0 0.0
    %873 = vmatprep.subr.mxu0 0.0
    %874 = vmatpush2.msra.mxu0 0.0
    %875 = vmatprep.subr.mxu0 0.0
    %876 = vmatpush2.msra.mxu0 0.0
    %877 = vmatprep.subr.mxu0 0.0
    %878 = vmatpush2.msra.mxu0 0.0
    %879 = vmatprep.subr.mxu0 0.0
    %880 = vmatpush2.msra.mxu0 0.0
    %881 = vmatprep.subr.mxu0 0.0
    %882 = vmatpush2.msra.mxu0 0.0
    %883 = vmatprep.subr.mxu0 0.0
    %884 = vmatpush2.msra.mxu0 0.0
    %885 = vmatprep.subr.mxu0 0.0
    %886 = vmatpush2.msra.mxu0 0.0
    %887 = vmatprep.mubr.f32.mxu0 0.0
    %888 = vmatmul.mubr.f32.gmra.mxu0 %v818
    %v889 = vpop.f32.mrf.mxu0
    %v890 = vadd.f32 %v248, %v889
    %v891 = vpop.f32.mrf.mxu0
    %892 = vmatprep.mubr.f32.mxu0 0.0
    %893 = vmatmul.mubr.f32.gmra.mxu0 %v821
    %v894 = vpop.f32.mrf.mxu0
    %v895 = vadd.f32 %v248, %v894
    %v896 = vpop.f32.mrf.mxu0
    %897 = vdwg.mxu0
    %v898 = vmax.f32 %v890, 0.0
    %v899 = vmax.f32 %v895, 0.0
    %v900 = vsel %vm201, %v898, -inf
    %v901 = vrot.slane %v900, 4
    %v902 = vmax.f32 %v900, %v901
    %v903 = vrot.slane %v902, 2
    %v904 = vmax.f32 %v902, %v903
    %v905 = vrot.slane %v904, 1
    %v906 = vmax.f32 %v904, %v905
    %v907 = vsel %vm209, %v898, -inf
    %v908 = vsel %vm211, %v899, -inf
    %v909 = vmax.f32 %v907, %v908
    %v910 = vrot.slane %v909, 4
    %v911 = vmax.f32 %v909, %v910
    %v912 = vrot.slane %v911, 2
    %v913 = vmax.f32 %v911, %v912
    %v914 = vrot.slane %v913, 1
    %v915 = vmax.f32 %v913, %v914
    %v916 = vrot.slane %v659, 3
    %v917 = vrot.slane %v660, 3
    %v918 = vsel %vm355, %v916, %v917
    %919 = vrot.lane.b32.xlu0 %v918, 24
    %v920 = vpop.permute.xlu0 %919
    %921 = vrot.lane.b32.xlu0 %v917, 24
    %v922 = vpop.permute.xlu0 %921
    %925 = vrot.lane.b32.xlu0 %v806, 32
    %v926 = vpop.permute.xlu0 %925
    %927 = vrot.lane.b32.xlu0 %v805, 32
    %v928 = vpop.permute.xlu0 %927
    %v931 = vsel %vm117, %v697, %v920
    %v932 = vsel %vm117, %v698, %v922
    %v933 = vsel %vm373, %v931, %v926
    %v934 = vsel %vm373, %v932, %v928
    %v936 = vsel %vm382, %v933, 0
    %v939 = vsel %vm382, %v934, 0
    %941 = vmatprep.subr.mxu0 0.0
    %942 = vmatpush1.msra.mxu0 0.0
    %943 = vmatprep.subr.mxu0 0.0
    %944 = vmatpush1.msra.mxu0 0.0
    %945 = vmatprep.subr.mxu0 0.0
    %946 = vmatpush1.msra.mxu0 0.0
    %947 = vmatprep.subr.mxu0 0.0
    %948 = vmatpush1.msra.mxu0 0.0
    %949 = vmatprep.subr.mxu0 0.0
    %950 = vmatpush1.msra.mxu0 0.0
    %951 = vmatprep.subr.mxu0 0.0
    %952 = vmatpush1.msra.mxu0 0.0
    %953 = vmatprep.subr.mxu0 0.0
    %954 = vmatpush1.msra.mxu0 0.0
    %955 = vmatprep.subr.mxu0 0.0
    %956 = vmatpush1.msra.mxu0 0.0
    %957 = vmatprep.subr.mxu0 0.0
    %958 = vmatpush1.msra.mxu0 0.0
    %959 = vmatprep.subr.mxu0 0.0
    %960 = vmatpush1.msra.mxu0 0.0
    %961 = vmatprep.subr.mxu0 0.0
    %962 = vmatpush1.msra.mxu0 0.0
    %963 = vmatprep.subr.mxu0 0.0
    %964 = vmatpush1.msra.mxu0 %v353
    %965 = vmatprep.subr.mxu0 0.0
    %966 = vmatpush1.msra.mxu0 %v352
    %967 = vmatprep.subr.mxu0 0.0
    %968 = vmatpush1.msra.mxu0 %v351
    %969 = vmatprep.subr.mxu0 0.0
    %970 = vmatpush1.msra.mxu0 %v350
    %971 = vmatprep.subr.mxu0 0.0
    %972 = vmatpush1.msra.mxu0 %v349
    %973 = vmatprep.subr.mxu0 0.0
    %974 = vmatpush2.msra.mxu0 0.0
    %975 = vmatprep.subr.mxu0 0.0
    %976 = vmatpush2.msra.mxu0 0.0
    %977 = vmatprep.subr.mxu0 0.0
    %978 = vmatpush2.msra.mxu0 0.0
    %979 = vmatprep.subr.mxu0 0.0
    %980 = vmatpush2.msra.mxu0 0.0
    %981 = vmatprep.subr.mxu0 0.0
    %982 = vmatpush2.msra.mxu0 0.0
    %983 = vmatprep.subr.mxu0 0.0
    %984 = vmatpush2.msra.mxu0 0.0
    %985 = vmatprep.subr.mxu0 0.0
    %986 = vmatpush2.msra.mxu0 0.0
    %987 = vmatprep.subr.mxu0 0.0
    %988 = vmatpush2.msra.mxu0 0.0
    %989 = vmatprep.subr.mxu0 0.0
    %990 = vmatpush2.msra.mxu0 0.0
    %991 = vmatprep.subr.mxu0 0.0
    %992 = vmatpush2.msra.mxu0 0.0
    %993 = vmatprep.subr.mxu0 0.0
    %994 = vmatpush2.msra.mxu0 0.0
    %995 = vmatprep.subr.mxu0 0.0
    %996 = vmatpush2.msra.mxu0 0.0
    %997 = vmatprep.subr.mxu0 0.0
    %998 = vmatpush2.msra.mxu0 0.0
    %999 = vmatprep.subr.mxu0 0.0
    %1000 = vmatpush2.msra.mxu0 0.0
    %1001 = vmatprep.subr.mxu0 0.0
    %1002 = vmatpush2.msra.mxu0 0.0
    %1003 = vmatprep.subr.mxu0 0.0
    %1004 = vmatpush2.msra.mxu0 0.0
    %1005 = vmatprep.mubr.f32.mxu0 0.0
    %1006 = vmatmul.mubr.f32.gmra.mxu0 %v936
    %v1007 = vpop.f32.mrf.mxu0
    %v1008 = vadd.f32 %v380, %v1007
    %v1009 = vpop.f32.mrf.mxu0
    %1010 = vmatprep.mubr.f32.mxu0 0.0
    %1011 = vmatmul.mubr.f32.gmra.mxu0 %v939
    %v1012 = vpop.f32.mrf.mxu0
    %v1013 = vadd.f32 %v380, %v1012
    %v1014 = vpop.f32.mrf.mxu0
    %1015 = vdwg.mxu0
    %v1016 = vmax.f32 %v1008, 0.0
    %v1017 = vmax.f32 %v1013, 0.0
    %v1018 = vsel %vm211, %v1016, -inf
    %v1019 = vrot.slane %v1018, 4
    %v1020 = vmax.f32 %v1018, %v1019
    %v1021 = vrot.slane %v1020, 2
    %v1022 = vmax.f32 %v1020, %v1021
    %v1023 = vrot.slane %v1022, 1
    %v1024 = vmax.f32 %v1022, %v1023
    %v1025 = vsel %vm473, %v1016, -inf
    %v1026 = vrot.slane %v1025, 4
    %v1027 = vmax.f32 %v1025, %v1026
    %v1028 = vrot.slane %v1027, 2
    %v1029 = vmax.f32 %v1027, %v1028
    %v1030 = vrot.slane %v1029, 1
    %v1031 = vmax.f32 %v1029, %v1030
    %v1032 = vsel %vm211, %v1017, -inf
    %v1033 = vrot.slane %v1032, 4
    %v1034 = vmax.f32 %v1032, %v1033
    %v1035 = vrot.slane %v1034, 2
    %v1036 = vmax.f32 %v1034, %v1035
    %v1037 = vrot.slane %v1036, 1
    %v1038 = vmax.f32 %v1036, %v1037
    %v1039 = vrot.slane %v659, 6
    %v1040 = vrot.slane %v660, 6
    %v1041 = vsel %vm494, %v1039, %v1040
    %1042 = vrot.lane.b32.xlu0 %v1041, 24
    %v1043 = vpop.permute.xlu0 %1042
    %1045 = vrot.lane.b32.xlu0 %v660, 32
    %v1046 = vpop.permute.xlu0 %1045
    %v1048 = vsel %vm117, %v815, %v1043
    %v1049 = vsel %vm373, %v1048, %v1046
    %v1051 = vsel %vm382, %v1049, 0
    %1053 = vmatprep.subr.mxu0 0.0
    %1054 = vmatpush1.msra.mxu0 0.0
    %1055 = vmatprep.subr.mxu0 0.0
    %1056 = vmatpush1.msra.mxu0 0.0
    %1057 = vmatprep.subr.mxu0 0.0
    %1058 = vmatpush1.msra.mxu0 0.0
    %1059 = vmatprep.subr.mxu0 0.0
    %1060 = vmatpush1.msra.mxu0 0.0
    %1061 = vmatprep.subr.mxu0 0.0
    %1062 = vmatpush1.msra.mxu0 0.0
    %1063 = vmatprep.subr.mxu0 0.0
    %1064 = vmatpush1.msra.mxu0 0.0
    %1065 = vmatprep.subr.mxu0 0.0
    %1066 = vmatpush1.msra.mxu0 0.0
    %1067 = vmatprep.subr.mxu0 0.0
    %1068 = vmatpush1.msra.mxu0 0.0
    %1069 = vmatprep.subr.mxu0 0.0
    %1070 = vmatpush1.msra.mxu0 0.0
    %1071 = vmatprep.subr.mxu0 0.0
    %1072 = vmatpush1.msra.mxu0 0.0
    %1073 = vmatprep.subr.mxu0 0.0
    %1074 = vmatpush1.msra.mxu0 0.0
    %1075 = vmatprep.subr.mxu0 0.0
    %1076 = vmatpush1.msra.mxu0 %v492
    %1077 = vmatprep.subr.mxu0 0.0
    %1078 = vmatpush1.msra.mxu0 %v491
    %1079 = vmatprep.subr.mxu0 0.0
    %1080 = vmatpush1.msra.mxu0 %v490
    %1081 = vmatprep.subr.mxu0 0.0
    %1082 = vmatpush1.msra.mxu0 %v489
    %1083 = vmatprep.subr.mxu0 0.0
    %1084 = vmatpush1.msra.mxu0 %v488
    %1085 = vmatprep.subr.mxu0 0.0
    %1086 = vmatpush2.msra.mxu0 0.0
    %1087 = vmatprep.subr.mxu0 0.0
    %1088 = vmatpush2.msra.mxu0 0.0
    %1089 = vmatprep.subr.mxu0 0.0
    %1090 = vmatpush2.msra.mxu0 0.0
    %1091 = vmatprep.subr.mxu0 0.0
    %1092 = vmatpush2.msra.mxu0 0.0
    %1093 = vmatprep.subr.mxu0 0.0
    %1094 = vmatpush2.msra.mxu0 0.0
    %1095 = vmatprep.subr.mxu0 0.0
    %1096 = vmatpush2.msra.mxu0 0.0
    %1097 = vmatprep.subr.mxu0 0.0
    %1098 = vmatpush2.msra.mxu0 0.0
    %1099 = vmatprep.subr.mxu0 0.0
    %1100 = vmatpush2.msra.mxu0 0.0
    %1101 = vmatprep.subr.mxu0 0.0
    %1102 = vmatpush2.msra.mxu0 0.0
    %1103 = vmatprep.subr.mxu0 0.0
    %1104 = vmatpush2.msra.mxu0 0.0
    %1105 = vmatprep.subr.mxu0 0.0
    %1106 = vmatpush2.msra.mxu0 0.0
    %1107 = vmatprep.subr.mxu0 0.0
    %1108 = vmatpush2.msra.mxu0 0.0
    %1109 = vmatprep.subr.mxu0 0.0
    %1110 = vmatpush2.msra.mxu0 0.0
    %1111 = vmatprep.subr.mxu0 0.0
    %1112 = vmatpush2.msra.mxu0 0.0
    %1113 = vmatprep.subr.mxu0 0.0
    %1114 = vmatpush2.msra.mxu0 0.0
    %1115 = vmatprep.subr.mxu0 0.0
    %1116 = vmatpush2.msra.mxu0 0.0
    %1117 = vmatprep.mubr.f32.mxu0 0.0
    %1118 = vmatmul.mubr.f32.gmra.mxu0 %v1051
    %v1119 = vpop.f32.mrf.mxu0
    %v1120 = vadd.f32 %v510, %v1119
    %v1121 = vpop.f32.mrf.mxu0
    %1122 = vdwg.mxu0
    %v1123 = vmax.f32 %v1120, 0.0
    %v1124 = vsel %vm211, %v1123, -inf
    %v1125 = vrot.slane %v1124, 4
    %v1126 = vmax.f32 %v1124, %v1125
    %v1127 = vrot.slane %v1126, 2
    %v1128 = vmax.f32 %v1126, %v1127
    %v1129 = vrot.slane %v1128, 1
    %v1130 = vmax.f32 %v1128, %v1129
    %v1131 = vsel %vm473, %v1123, -inf
    %v1132 = vrot.slane %v1131, 4
    %v1133 = vmax.f32 %v1131, %v1132
    %v1134 = vrot.slane %v1133, 2
    %v1135 = vmax.f32 %v1133, %v1134
    %v1136 = vrot.slane %v1135, 1
    %v1137 = vmax.f32 %v1135, %v1136
    %1139 = vrot.lane.b32.xlu0 %v797, 8
    %v1140 = vpop.permute.xlu0 %1139
    %1143 = vrot.lane.b32.xlu0 %v906, 16
    %v1144 = vpop.permute.xlu0 %1143
    %1147 = vrot.lane.b32.xlu0 %v915, 24
    %v1148 = vpop.permute.xlu0 %1147
    %1151 = vrot.lane.b32.xlu0 %v1024, 32
    %v1152 = vpop.permute.xlu0 %1151
    %1155 = vrot.lane.b32.xlu0 %v1031, 40
    %v1156 = vpop.permute.xlu0 %1155
    %1159 = vrot.lane.b32.xlu0 %v1038, 48
    %v1160 = vpop.permute.xlu0 %1159
    %1163 = vrot.lane.b32.xlu0 %v1130, 56
    %v1164 = vpop.permute.xlu0 %1163
    %1167 = vrot.lane.b32.xlu0 %v1137, 64
    %v1168 = vpop.permute.xlu0 %1167
    %v1170 = vsel %vm105, %v788, %v1140
    %v1171 = vsel %vm108, %v1170, %v1144
    %v1172 = vsel %vm117, %v1171, %v1148
    %v1173 = vsel %vm373, %v1172, %v1152
    %v1174 = vsel %vm382, %v1173, %v1156
    %v1175 = vsel %vm637, %v1174, %v1160
    %v1176 = vsel %vm639, %v1175, %v1164
    %v1177 = vsel %vm641, %v1176, %v1168
    %v1179 = vrot.slane %v1177, 7
    %vm1181 = vcmask 1040384
    %v1182 = vsel %vm1181, %v642, %v1179
    %v1183 = vld [vmem:[%s9] sm:$0xff]
    %v1184 = vld [vmem:[%s9 + $0x8] sm:$0xff]
    %v1185 = vld [vmem:[%s9 + $0x10] sm:$0xff]
    %v1186 = vld [vmem:[%s9 + $0x18] sm:$0xff]
    %v1187 = vld [vmem:[%s9 + $0x20] sm:$0xff]
    %v1188 = vld [vmem:[%s9 + $0x28] sm:$0xff]
    %v1189 = vld [vmem:[%s9 + $0x30] sm:$0xff]
    %v1190 = vld [vmem:[%s9 + $0x38] sm:$0xff]
    %v1191 = vld [vmem:[%s9 + $0x40] sm:$0xff]
    %v1192 = vld [vmem:[%s9 + $0x48] sm:$0xff]
    %v1193 = vld [vmem:[%s9 + $0x50] sm:$0xff]
    %v1194 = vld [vmem:[%s9 + $0x58] sm:$0xff]
    %v1195 = vld [vmem:[%s9 + $0x60] sm:$0xff]
    %v1196 = vld [vmem:[%s9 + $0x68] sm:$0xff]
    %v1197 = vld [vmem:[%s9 + $0x70] sm:$0xff]
    %v1198 = vld [vmem:[%s9 + $0x78] sm:$0xff]
    %v1199 = vld [vmem:[%s9 + $0x80] sm:$0xff]
    %v1200 = vld [vmem:[%s9 + $0x88] sm:$0xff]
    %v1201 = vld [vmem:[%s10] sm:$0x3]
    %v1203 = vlaneseq
    %v1204 = vshrl.u32 %v1203, 7
    %v1205 = vsub.s32 0, %v1204
    %v1206 = vrot.slane %v1201, %v1205
    %v1207 = vlaneseq
    %v1208 = vshrl.u32 %v1207, 7
    %v1209 = vsub.s32 1, %v1208
    %v1210 = vrot.slane %v1201, %v1209
    %vm1213 = vcmask 588800
    %v1215 = vsel %vm1213, %v1182, 0
    %1217 = vmatprep.subr.mxu0 0.0
    %1218 = vmatpush1.msra.mxu0 0.0
    %1219 = vmatprep.subr.mxu0 0.0
    %1220 = vmatpush1.msra.mxu0 0.0
    %1221 = vmatprep.subr.mxu0 0.0
    %1222 = vmatpush1.msra.mxu0 0.0
    %1223 = vmatprep.subr.mxu0 0.0
    %1224 = vmatpush1.msra.mxu0 0.0
    %1225 = vmatprep.subr.mxu0 0.0
    %1226 = vmatpush1.msra.mxu0 0.0
    %1227 = vmatprep.subr.mxu0 0.0
    %1228 = vmatpush1.msra.mxu0 0.0
    %1229 = vmatprep.subr.mxu0 0.0
    %1230 = vmatpush1.msra.mxu0 0.0
    %1231 = vmatprep.subr.mxu0 %v1200
    %1232 = vmatpush1.msra.mxu0 %v1199
    %1233 = vmatprep.subr.mxu0 %v1198
    %1234 = vmatpush1.msra.mxu0 %v1197
    %1235 = vmatprep.subr.mxu0 %v1196
    %1236 = vmatpush1.msra.mxu0 %v1195
    %1237 = vmatprep.subr.mxu0 %v1194
    %1238 = vmatpush1.msra.mxu0 %v1193
    %1239 = vmatprep.subr.mxu0 %v1192
    %1240 = vmatpush1.msra.mxu0 %v1191
    %1241 = vmatprep.subr.mxu0 %v1190
    %1242 = vmatpush1.msra.mxu0 %v1189
    %1243 = vmatprep.subr.mxu0 %v1188
    %1244 = vmatpush1.msra.mxu0 %v1187
    %1245 = vmatprep.subr.mxu0 %v1186
    %1246 = vmatpush1.msra.mxu0 %v1185
    %1247 = vmatprep.subr.mxu0 %v1184
    %1248 = vmatpush1.msra.mxu0 %v1183
    %1249 = vmatprep.subr.mxu0 0.0
    %1250 = vmatpush2.msra.mxu0 0.0
    %1251 = vmatprep.subr.mxu0 0.0
    %1252 = vmatpush2.msra.mxu0 0.0
    %1253 = vmatprep.subr.mxu0 0.0
    %1254 = vmatpush2.msra.mxu0 0.0
    %1255 = vmatprep.subr.mxu0 0.0
    %1256 = vmatpush2.msra.mxu0 0.0
    %1257 = vmatprep.subr.mxu0 0.0
    %1258 = vmatpush2.msra.mxu0 0.0
    %1259 = vmatprep.subr.mxu0 0.0
    %1260 = vmatpush2.msra.mxu0 0.0
    %1261 = vmatprep.subr.mxu0 0.0
    %1262 = vmatpush2.msra.mxu0 0.0
    %1263 = vmatprep.subr.mxu0 0.0
    %1264 = vmatpush2.msra.mxu0 0.0
    %1265 = vmatprep.subr.mxu0 0.0
    %1266 = vmatpush2.msra.mxu0 0.0
    %1267 = vmatprep.subr.mxu0 0.0
    %1268 = vmatpush2.msra.mxu0 0.0
    %1269 = vmatprep.subr.mxu0 0.0
    %1270 = vmatpush2.msra.mxu0 0.0
    %1271 = vmatprep.subr.mxu0 0.0
    %1272 = vmatpush2.msra.mxu0 0.0
    %1273 = vmatprep.subr.mxu0 0.0
    %1274 = vmatpush2.msra.mxu0 0.0
    %1275 = vmatprep.subr.mxu0 0.0
    %1276 = vmatpush2.msra.mxu0 0.0
    %1277 = vmatprep.subr.mxu0 0.0
    %1278 = vmatpush2.msra.mxu0 0.0
    %1279 = vmatprep.subr.mxu0 0.0
    %1280 = vmatpush2.msra.mxu0 0.0
    %1281 = vmatprep.mubr.f32.mxu0 0.0
    %1282 = vmatmul.mubr.f32.gmra.mxu0 %v1215
    %v1283 = vpop.f32.mrf.mxu0
    %v1284 = vadd.f32 %v1206, %v1283
    %v1285 = vpop.f32.mrf.mxu0
    %v1286 = vadd.f32 %v1210, %v1285
    %1287 = vdwg.mxu0
    %v1288 = vmax.f32 %v1284, 0.0
    %v1289 = vmax.f32 %v1286, 0.0
    %v1290 = vld [vmem:[%s11] sm:$0xff]
    %v1291 = vld [vmem:[%s11 + $0x8] sm:$0xff]
    %v1292 = vld [vmem:[%s11 + $0x10] sm:$0xff]
    %v1293 = vld [vmem:[%s11 + $0x18] sm:$0xff]
    %v1294 = vld [vmem:[%s11 + $0x20] sm:$0xff]
    %v1295 = vld [vmem:[%s11 + $0x28] sm:$0xff]
    %v1296 = vld [vmem:[%s11 + $0x30] sm:$0xff]
    %v1297 = vld [vmem:[%s11 + $0x38] sm:$0xff]
    %v1298 = vld [vmem:[%s11 + $0x40] sm:$0xff]
    %v1299 = vld [vmem:[%s11 + $0x48] sm:$0xff]
    %v1300 = vld [vmem:[%s11 + $0x50] sm:$0xff]
    %v1301 = vld [vmem:[%s11 + $0x58] sm:$0xff]
    %v1302 = vld [vmem:[%s11 + $0x60] sm:$0xff]
    %v1303 = vld [vmem:[%s11 + $0x68] sm:$0xff]
    %v1304 = vld [vmem:[%s11 + $0x70] sm:$0xff]
    %v1305 = vld [vmem:[%s11 + $0x78] sm:$0xff]
    %v1306 = vld [vmem:[%s11 + $0x80] sm:$0xff]
    %v1307 = vld [vmem:[%s11 + $0x88] sm:$0xff]
    %v1308 = vld [vmem:[%s11 + $0x90] sm:$0xff]
    %v1309 = vld [vmem:[%s11 + $0x98] sm:$0xff]
    %v1310 = vld [vmem:[%s11 + $0xa0] sm:$0xff]
    %v1311 = vld [vmem:[%s11 + $0xa8] sm:$0xff]
    %v1312 = vld [vmem:[%s11 + $0xb0] sm:$0xff]
    %v1313 = vld [vmem:[%s11 + $0xb8] sm:$0xff]
    %v1314 = vld [vmem:[%s11 + $0xc0] sm:$0xff]
    %v1315 = vld [vmem:[%s11 + $0xc8] sm:$0xff]
    %v1316 = vld [vmem:[%s11 + $0xd0] sm:$0xff]
    %v1317 = vld [vmem:[%s11 + $0xd8] sm:$0xff]
    %v1318 = vld [vmem:[%s11 + $0xe0] sm:$0xff]
    %v1319 = vld [vmem:[%s11 + $0xe8] sm:$0xff]
    %v1320 = vld [vmem:[%s11 + $0xf0] sm:$0xff]
    %v1321 = vld [vmem:[%s11 + $0xf8] sm:$0xff]
    %v1322 = vld [vmem:[%s12] sm:$0x1]
    %v1324 = vlaneseq
    %v1325 = vshrl.u32 %v1324, 7
    %v1326 = vsub.s32 0, %v1325
    %v1327 = vrot.slane %v1322, %v1326
    %1329 = vmatprep.subr.mxu0 0.0
    %1330 = vmatpush1.msra.mxu0 %v1305
    %1331 = vmatprep.subr.mxu0 0.0
    %1332 = vmatpush1.msra.mxu0 %v1304
    %1333 = vmatprep.subr.mxu0 0.0
    %1334 = vmatpush1.msra.mxu0 %v1303
    %1335 = vmatprep.subr.mxu0 0.0
    %1336 = vmatpush1.msra.mxu0 %v1302
    %1337 = vmatprep.subr.mxu0 0.0
    %1338 = vmatpush1.msra.mxu0 %v1301
    %1339 = vmatprep.subr.mxu0 0.0
    %1340 = vmatpush1.msra.mxu0 %v1300
    %1341 = vmatprep.subr.mxu0 0.0
    %1342 = vmatpush1.msra.mxu0 %v1299
    %1343 = vmatprep.subr.mxu0 0.0
    %1344 = vmatpush1.msra.mxu0 %v1298
    %1345 = vmatprep.subr.mxu0 0.0
    %1346 = vmatpush1.msra.mxu0 %v1297
    %1347 = vmatprep.subr.mxu0 0.0
    %1348 = vmatpush1.msra.mxu0 %v1296
    %1349 = vmatprep.subr.mxu0 0.0
    %1350 = vmatpush1.msra.mxu0 %v1295
    %1351 = vmatprep.subr.mxu0 0.0
    %1352 = vmatpush1.msra.mxu0 %v1294
    %1353 = vmatprep.subr.mxu0 0.0
    %1354 = vmatpush1.msra.mxu0 %v1293
    %1355 = vmatprep.subr.mxu0 0.0
    %1356 = vmatpush1.msra.mxu0 %v1292
    %1357 = vmatprep.subr.mxu0 0.0
    %1358 = vmatpush1.msra.mxu0 %v1291
    %1359 = vmatprep.subr.mxu0 0.0
    %1360 = vmatpush1.msra.mxu0 %v1290
    %1361 = vmatprep.subr.mxu0 0.0
    %1362 = vmatpush2.msra.mxu0 %v1321
    %1363 = vmatprep.subr.mxu0 0.0
    %1364 = vmatpush2.msra.mxu0 %v1320
    %1365 = vmatprep.subr.mxu0 0.0
    %1366 = vmatpush2.msra.mxu0 %v1319
    %1367 = vmatprep.subr.mxu0 0.0
    %1368 = vmatpush2.msra.mxu0 %v1318
    %1369 = vmatprep.subr.mxu0 0.0
    %1370 = vmatpush2.msra.mxu0 %v1317
    %1371 = vmatprep.subr.mxu0 0.0
    %1372 = vmatpush2.msra.mxu0 %v1316
    %1373 = vmatprep.subr.mxu0 0.0
    %1374 = vmatpush2.msra.mxu0 %v1315
    %1375 = vmatprep.subr.mxu0 0.0
    %1376 = vmatpush2.msra.mxu0 %v1314
    %1377 = vmatprep.subr.mxu0 0.0
    %1378 = vmatpush2.msra.mxu0 %v1313
    %1379 = vmatprep.subr.mxu0 0.0
    %1380 = vmatpush2.msra.mxu0 %v1312
    %1381 = vmatprep.subr.mxu0 0.0
    %1382 = vmatpush2.msra.mxu0 %v1311
    %1383 = vmatprep.subr.mxu0 0.0
    %1384 = vmatpush2.msra.mxu0 %v1310
    %1385 = vmatprep.subr.mxu0 0.0
    %1386 = vmatpush2.msra.mxu0 %v1309
    %1387 = vmatprep.subr.mxu0 0.0
    %1388 = vmatpush2.msra.mxu0 %v1308
    %1389 = vmatprep.subr.mxu0 0.0
    %1390 = vmatpush2.msra.mxu0 %v1307
    %1391 = vmatprep.subr.mxu0 0.0
    %1392 = vmatpush2.msra.mxu0 %v1306
    %1393 = vmatprep.mubr.f32.mxu0 %v1289
    %1394 = vmatmul.mubr.f32.gmra.mxu0 %v1288
    %v1395 = vpop.f32.mrf.mxu0
    %v1396 = vadd.f32 %v1327, %v1395
    %v1397 = vpop.f32.mrf.mxu0
    %1398 = vdwg.mxu0
    %vm1399 = vcmask 74752
    %1400 = vst.msk [vmem:[#allocation2] sm:$0x3] %vm1399, %v1396
    // Predicated region
    $region54: #{tpu_custom_call.1} parent=1 // pred_check
      _
    $region55: #{tpu_custom_call.1} parent=1 // pred_check_branch
      %1402 = sbr.rel (0) target = $region57
    $region56: #{tpu_custom_call.1} parent=1 // pred_region
      %s1404 = ssub.s32 32, 32
      %1405 = vsyncadd [#allocation3], %s1404
      %s1407 = sshll.u32 [#allocation2], 4
      %s1408 = int_to_ptr.vmem [resolvable:$true] %s1407
      %1410 = dma.vmem_to_hbm [thread:$0]  %s1408, 32, %s13, [#allocation3]
    $region57: #{tpu_custom_call.1} parent=1 // pred_fallthru
      _
    // Predicated region
    $region58: #{tpu_custom_call.1} parent=1 // pred_check
      _
    $region59: #{tpu_custom_call.1} parent=1 // pred_check_branch
      %1412 = sbr.rel (0) target = $region61
    $region60: #{tpu_custom_call.1} parent=1 // pred_region
      %1413 = dma.done [#allocation3], 32
    $region61: #{tpu_custom_call.1} parent=1 // pred_fallthru
      _
    %1414 = vsyncpa [#allocation3], 1

</llo_original>
